<compile_context>
chip_gen: v5e
topology: v5e:2x2
jax: 0.10.0
libtpu: 0.0.40
codegen_flags: <defaults>
</compile_context>

<pallas_src>
import functools

import jax
import jax.numpy as jnp
import numpy as np
from jax import lax
from jax.experimental import pallas as pl
from jax.experimental.pallas import tpu as pltpu

IGNORE_INDEX = 255


# --------------------------------------------------------------------------
# small host-side helpers
# --------------------------------------------------------------------------
def _pow2_floor(n):
    n = max(int(n), 1)
    return 1 << (n.bit_length() - 1)


def _pow2_ceil(n):
    n = max(int(n), 1)
    return 1 << (n - 1).bit_length()


def _round_up(x, m):
    return ((x + m - 1) // m) * m


def _vmem_capacity_bytes():
    """Per-generation VMEM capacity (v5e/v6e 128 MiB, v7x 64 MiB); safe fallback."""
    try:
        info = pltpu.get_tpu_info()
        cap = int(getattr(info, "vmem_capacity_bytes", 0))
        if cap > 0:
            return cap
    except Exception:
        pass
    return 64 * 1024 * 1024  # conservative (v7x-sized) default


# --------------------------------------------------------------------------
# Kernel 1: softmax over classes + packed descending-sort key, tiled over P.
# key = -((bitcast_i32(err) << 1) | fg)  -> ascending sort == (err, fg) desc.
# --------------------------------------------------------------------------
def _softmax_pack_kernel(logits_ref, labels_ref, key_ref, *, ignore_index):
    x = logits_ref[...]                       # [C, TP] f32 logits
    lab = labels_ref[...]                     # [1, TP] int32 labels
    c, tp = x.shape

    # softmax over the class (sublane) axis
    m = jnp.max(x, axis=0, keepdims=True)
    e = jnp.exp(x - m)
    s = jnp.sum(e, axis=0, keepdims=True)
    probs = e * pl.reciprocal(s)              # accurate reciprocal (EUP) + mul

    valid = lab != ignore_index               # [1, TP]
    cls = jax.lax.broadcasted_iota(jnp.int32, (c, tp), 0)
    fg = jnp.logical_and(lab == cls, valid)   # [C, TP] bool
    err = jnp.where(valid, jnp.abs(fg.astype(jnp.float32) - probs), 0.0)

    # err in [0, 1]: its i32 bit pattern is nonnegative and order-preserving.
    bits = pltpu.bitcast(err, jnp.int32)
    packed = (bits << 1) | fg.astype(jnp.int32)
    key_ref[...] = -packed                    # ascending sort == descending (err, fg)


# --------------------------------------------------------------------------
# Kernel 2: blocked Lovasz extension.  Fully parallel grid over outer pixel
# blocks; the cross-block fg prefix comes precomputed from glue.  Inside each
# block, an unrolled fori_loop walks `sub`-wide tiles: one bf16 [C,sub]x[sub,sub]
# MXU matmul per tile for the inclusive cumsum (exact: 0/1 operands, f32 acc),
# carry held in vregs.
# --------------------------------------------------------------------------
def _lovasz_block_kernel(err_ref, fg_ref, gts_ref, prefix_ref, tri_ref, out_ref,
                         *, sub, n_sub):
    gts = gts_ref[...]                        # [C, 1] per-class fg totals (f32)
    tri = tri_ref[...]                        # [sub, sub] bf16, tri[j, i] = 1 iff j <= i
    c = gts.shape[0]
    base = pl.program_id(0) * (sub * n_sub)   # global pixel offset of this outer block

    def body(s, carry):
        cum_carry, acc = carry                # [C,1] cumulative fg so far, [C,1] loss acc
        off = pl.multiple_of(s * sub, sub)
        err = err_ref[:, pl.ds(off, sub)]     # [C, sub] f32 (sorted desc per class)
        fg_b = fg_ref[:, pl.ds(off, sub)]     # [C, sub] bf16 (0/1, permuted identically)
        fg = fg_b.astype(jnp.float32)

        # Within-tile inclusive cumsum of fg: single bf16 MXU pass, f32 acc (exact).
        cum_in = jnp.dot(fg_b, tri, preferred_element_type=jnp.float32)  # [C, sub]
        cum_fg = cum_in + cum_carry

        # Global 0-based position along the per-class sorted sequence.
        pos_i = base + off + jax.lax.broadcasted_iota(jnp.int32, (c, sub), 1)
        pos = pos_i.astype(jnp.float32)
        is_first = pos_i == 0

        # cumsum(1 - fg) == (pos + 1) - cumsum(fg)  -> no second matmul.
        union = gts + (pos + 1.0) - cum_fg
        jac = 1.0 - (gts - cum_fg) * pl.reciprocal(union)

        # Jaccard at the previous index (exclusive cumsums); index 0 -> 0.
        cum_fg_ex = cum_fg - fg
        union_ex = jnp.where(is_first, 1.0, gts + pos - cum_fg_ex)  # avoid 0/0 at pos 0
        jac_prev = jnp.where(is_first, 0.0,
                             1.0 - (gts - cum_fg_ex) * pl.reciprocal(union_ex))
        grad = jac - jac_prev                 # lovasz_grad(fg_sorted), this tile

        acc = acc + jnp.sum(err * grad, axis=1, keepdims=True)
        cum_carry = cum_carry + cum_in[:, sub - 1:sub]
        return cum_carry, acc

    carry0 = prefix_ref[0]                    # [C, 1] fg count before this outer block
    acc0 = jnp.zeros((c, 1), jnp.float32)
    _, acc = lax.fori_loop(0, n_sub, body, (carry0, acc0), unroll=True)

    present = (gts > 0.0).astype(jnp.float32)  # mask classes not present in labels
    out_ref[0] = jnp.sum(acc * present, axis=0, keepdims=True)   # per-block partial loss


# --------------------------------------------------------------------------
# Host-side wrapper.
# --------------------------------------------------------------------------
def lovasz_softmax_loss(output_nchw, target_nhw, ignore_index=IGNORE_INDEX):
    """LovaszSoftmax().forward(output, target) — output NCHW logits, target NHW ints."""
    b, c, h, w = output_nchw.shape
    p = b * h * w

    # ---- per-generation tile / VMEM budgeting --------------------------
    vmem_cap = _vmem_capacity_bytes()
    vmem_limit = min(vmem_cap // 2, 64 * 1024 * 1024)   # 64 MiB (v5e/v6e) / 32 MiB (v7x)
    budget_k1 = vmem_limit // 4
    budget_k2 = vmem_limit // 8

    p_cap = 128 * _pow2_ceil((p + 127) // 128)

    # Kernel-1 pixel tile (lanes): power-of-two multiple of 128 from byte budget.
    bytes_px_k1 = 2 * (8 * c + 4)             # dbl-buffered f32 logits + i32 keys + i32 labels
    tp = 128 * _pow2_floor(max(budget_k1 // bytes_px_k1, 128) // 128)
    tp = min(tp, 65536, p_cap)

    # Kernel-2 tiling: `sub`-wide MXU cumsum tiles, n_sub of them per grid step.
    sub = min(512, tp)
    bytes_px_k2 = 12 * c + 8                  # dbl-buffered f32 err + bf16 fg
    n_sub = min(8, _pow2_floor(max(budget_k2 // (bytes_px_k2 * sub), 1)))
    ob = min(sub * n_sub, p_cap)              # outer block (pixels per grid step)
    n_sub = ob // sub

    # All tile sizes are power-of-two multiples of 128 -> they all divide p_pad.
    p_pad = _round_up(p, max(tp, ob))
    n_tp = p_pad // tp
    n_ob = p_pad // ob

    # ---- glue: NCHW -> class-major [C, P]; labels -> [1, P]; pad ignore ----
    logits_cp = jnp.transpose(output_nchw, (1, 0, 2, 3)).reshape(c, p).astype(jnp.float32)
    labels = target_nhw.reshape(1, p).astype(jnp.int32)
    if p_pad != p:
        logits_cp = jnp.pad(logits_cp, ((0, 0), (0, p_pad - p)))
        labels = jnp.pad(labels, ((0, 0), (0, p_pad - p)), constant_values=ignore_index)

    cparams = pltpu.CompilerParams(dimension_semantics=("parallel",),
                                   vmem_limit_bytes=vmem_limit)

    # ---- kernel 1: softmax + packed sort keys, pixel-tiled & parallel ----
    keys = pl.pallas_call(
        functools.partial(_softmax_pack_kernel, ignore_index=ignore_index),
        grid=(n_tp,),
        in_specs=[pl.BlockSpec((c, tp), lambda i: (0, i)),
                  pl.BlockSpec((1, tp), lambda i: (0, i))],
        out_specs=pl.BlockSpec((c, tp), lambda i: (0, i)),
        out_shape=jax.ShapeDtypeStruct((c, p_pad), jnp.int32),
        compiler_params=cparams,
    )(logits_cp, labels)

    # TODO(synk): torch.sort (descending per-class co-sort) has no Pallas TPU
    # primitive; done as a single packed-key XLA sort in glue.
    keys_sorted = lax.sort(keys, dimension=1, is_stable=False)
    packed = -keys_sorted                                            # (err, fg) descending
    fg_bits = jnp.bitwise_and(packed, 1)                             # [C, P] 0/1 int32
    errs_sorted = lax.bitcast_convert_type(jnp.right_shift(packed, 1), jnp.float32)
    fg_sorted = fg_bits.astype(jnp.bfloat16)                         # exact 0/1

    # Per-outer-block fg counts, exclusive prefix (removes the serial carry)
    # and per-class totals (permutation-invariant).
    block_counts = fg_bits.reshape(c, n_ob, ob).sum(axis=2)          # [C, n_ob] int32
    gts = block_counts.sum(axis=1, keepdims=True).astype(jnp.float32)            # [C, 1]
    prefix = (jnp.cumsum(block_counts, axis=1) - block_counts).astype(jnp.float32)
    prefix = jnp.transpose(prefix)[:, :, None]                       # (n_ob, C, 1)

    # Upper-triangular [sub, sub] cumsum operator (bf16, exact 0/1), built once.
    tri = (jnp.arange(sub)[:, None] <= jnp.arange(sub)[None, :]).astype(jnp.bfloat16)

    # ---- kernel 2: blocked Lovasz extension, parallel over outer blocks ----
    partials = pl.pallas_call(
        functools.partial(_lovasz_block_kernel, sub=sub, n_sub=n_sub),
        grid=(n_ob,),
        in_specs=[pl.BlockSpec((c, ob), lambda k: (0, k)),           # errs (f32)
                  pl.BlockSpec((c, ob), lambda k: (0, k)),           # fg (bf16)
                  pl.BlockSpec((c, 1), lambda k: (0, 0)),            # gts
                  pl.BlockSpec((1, c, 1), lambda k: (k, 0, 0)),      # block prefix
                  pl.BlockSpec((sub, sub), lambda k: (0, 0))],       # tri (bf16)
        out_specs=pl.BlockSpec((1, 1, 1), lambda k: (k, 0, 0)),
        out_shape=jax.ShapeDtypeStruct((n_ob, 1, 1), jnp.float32),
        compiler_params=cparams,
    )(errs_sorted, fg_sorted, gts, prefix, tri)

    n_present = jnp.sum((gts > 0.0).astype(jnp.float32))
    return jnp.sum(partials) / jnp.maximum(n_present, 1.0)


# --------------------------------------------------------------------------
# Pure-JAX reference replicating the PyTorch semantics (static-shape masked).
# --------------------------------------------------------------------------
def _reference_loss(output, target, ignore_index=IGNORE_INDEX):
    b, c, h, w = output.shape
    probas = jax.nn.softmax(output.astype(jnp.float32), axis=1)
    probas = jnp.transpose(probas, (0, 2, 3, 1)).reshape(-1, c)
    labels = target.reshape(-1)
    valid = labels != ignore_index
    losses, present = [], []
    for ci in range(c):
        fg = ((labels == ci) & valid).astype(jnp.float32)
        err = jnp.where(valid, jnp.abs(fg - probas[:, ci]), 0.0)
        perm = jnp.argsort(-err)
        err_s = err[perm]
        fg_s = fg[perm]
        gts = jnp.sum(fg_s)
        inter = gts - jnp.cumsum(fg_s)
        union = gts + jnp.cumsum(1.0 - fg_s)
        jac = 1.0 - inter / union
        grad = jnp.concatenate([jac[:1], jac[1:] - jac[:-1]])
        losses.append(jnp.sum(err_s * grad))
        present.append((jnp.sum(fg) > 0).astype(jnp.float32))
    losses = jnp.stack(losses)
    present = jnp.stack(present)
    return jnp.sum(losses * present) / jnp.maximum(jnp.sum(present), 1.0)


if __name__ == "__main__":
    key = jax.random.PRNGKey(0)
    k1, k2, k3 = jax.random.split(key, 3)
    B, C, H, W = 2, 4, 16, 16

    output = jax.random.normal(k1, (B, C, H, W), dtype=jnp.float32)
    target = jax.random.randint(k2, (B, H, W), 0, C)
    ignore_mask = jax.random.uniform(k3, (B, H, W)) < 0.1
    target = jnp.where(ignore_mask, IGNORE_INDEX, target).astype(jnp.int32)

    loss_fn = jax.jit(lovasz_softmax_loss)
    loss = jax.block_until_ready(loss_fn(output, target))

    ref = _reference_loss(output, target)
    np.testing.assert_allclose(np.asarray(loss), np.asarray(ref), rtol=1e-5, atol=1e-5)

    print("KERNEL_OK")
</pallas_src>

<mosaic_0001>
module attributes {stable_mosaic.version = 11 : i64} {
  func.func @_softmax_pack_kernel(%arg0: i32, %arg1: memref<4x512xf32, #tpu.memory_space<vmem>>, %arg2: memref<1x512xi32, #tpu.memory_space<vmem>>, %arg3: memref<4x512xi32, #tpu.memory_space<vmem>>) attributes {dimension_semantics = [#tpu.dimension_semantics<parallel>], iteration_bounds = array<i64: 1>, scalar_prefetch = 0 : i64, scratch_operands = 0 : i64, tpu.core_type = #tpu.core_type<tc>, window_params = [{transform_indices = @transform_0, window_bounds = array<i64: 4, 512>}, {transform_indices = @transform_1, window_bounds = array<i64: 1, 512>}, {transform_indices = @transform_2, window_bounds = array<i64: 4, 512>}]} {
    %c0 = arith.constant 0 : index
    %c0_0 = arith.constant 0 : index
    %0 = vector.load %arg1[%c0, %c0_0] : memref<4x512xf32, #tpu.memory_space<vmem>>, vector<4x512xf32>
    %c0_1 = arith.constant 0 : index
    %c0_2 = arith.constant 0 : index
    %1 = vector.load %arg2[%c0_1, %c0_2] : memref<1x512xi32, #tpu.memory_space<vmem>>, vector<1x512xi32>
    %cst = arith.constant dense<0xFF800000> : vector<512xf32>
    %2 = vector.multi_reduction <maximumf>, %0, %cst [0] : vector<4x512xf32> to vector<512xf32>
    %3 = vector.shape_cast %2 : vector<512xf32> to vector<1x512xf32>
    %4 = vector.broadcast %3 : vector<1x512xf32> to vector<4x512xf32>
    %5 = arith.subf %0, %4 : vector<4x512xf32>
    %6 = math.exp %5 : vector<4x512xf32>
    %cst_3 = arith.constant dense<0.000000e+00> : vector<512xf32>
    %7 = vector.multi_reduction <add>, %6, %cst_3 [0] : vector<4x512xf32> to vector<512xf32>
    %8 = vector.shape_cast %7 : vector<512xf32> to vector<1x512xf32>
    %9 = tpu.reciprocal %8 : vector<1x512xf32> -> vector<1x512xf32>
    %10 = vector.broadcast %9 : vector<1x512xf32> to vector<4x512xf32>
    %11 = arith.mulf %6, %10 : vector<4x512xf32>
    %c255_i32 = arith.constant 255 : i32
    %12 = vector.broadcast %c255_i32 : i32 to vector<1x512xi32>
    %13 = arith.cmpi ne, %1, %12 : vector<1x512xi32>
    %14 = tpu.iota {dimensions = array<i32: 0>} : vector<4x512xi32>
    %15 = vector.broadcast %1 : vector<1x512xi32> to vector<4x512xi32>
    %16 = arith.cmpi eq, %15, %14 : vector<4x512xi32>
    %17 = vector.broadcast %13 : vector<1x512xi1> to vector<4x512xi1>
    %18 = arith.andi %16, %17 : vector<4x512xi1>
    %19 = arith.extui %18 : vector<4x512xi1> to vector<4x512xi32>
    %20 = arith.sitofp %19 : vector<4x512xi32> to vector<4x512xf32>
    %21 = arith.subf %20, %11 : vector<4x512xf32>
    %22 = math.absf %21 : vector<4x512xf32>
    %cst_4 = arith.constant 0.000000e+00 : f32
    %23 = vector.shape_cast %13 : vector<1x512xi1> to vector<1x512xi1>
    %24 = vector.broadcast %23 : vector<1x512xi1> to vector<4x512xi1>
    %25 = vector.broadcast %cst_4 : f32 to vector<4x512xf32>
    %26 = arith.select %24, %22, %25 : vector<4x512xi1>, vector<4x512xf32>
    %27 = tpu.bitcast %26 : vector<4x512xf32> -> vector<4x512xi32>
    %c1_i32 = arith.constant 1 : i32
    %28 = vector.broadcast %c1_i32 : i32 to vector<4x512xi32>
    %29 = arith.shli %27, %28 : vector<4x512xi32>
    %30 = arith.extui %18 : vector<4x512xi1> to vector<4x512xi32>
    %31 = arith.ori %29, %30 : vector<4x512xi32>
    %c0_i32 = arith.constant 0 : i32
    %32 = vector.broadcast %c0_i32 : i32 to vector<4x512xi32>
    %33 = arith.subi %32, %31 : vector<4x512xi32>
    %c0_5 = arith.constant 0 : index
    %c0_6 = arith.constant 0 : index
    %34 = vector.load %arg3[%c0_5, %c0_6] : memref<4x512xi32, #tpu.memory_space<vmem>>, vector<4x512xi32>
    tpu.vector_store %arg3[%c0_5, %c0_6], %33 {strides = array<i32>} : memref<4x512xi32, #tpu.memory_space<vmem>>, vector<4x512xi32>,
    return
  }
  func.func @transform_0(%arg0: i32) -> (i32, i32) {
    %c0_i32 = arith.constant 0 : i32
    %c0_i32_0 = arith.constant 0 : i32
    return %c0_i32, %arg0 : i32, i32
  }
  func.func @transform_1(%arg0: i32) -> (i32, i32) {
    %c0_i32 = arith.constant 0 : i32
    %c0_i32_0 = arith.constant 0 : i32
    return %c0_i32, %arg0 : i32, i32
  }
  func.func @transform_2(%arg0: i32) -> (i32, i32) {
    %c0_i32 = arith.constant 0 : i32
    %c0_i32_0 = arith.constant 0 : i32
    return %c0_i32, %arg0 : i32, i32
  }
}

module attributes {stable_mosaic.version = 11 : i64} {
  func.func @_lovasz_block_kernel(%arg0: i32, %arg1: memref<4x512xf32, #tpu.memory_space<vmem>>, %arg2: memref<4x512xbf16, #tpu.memory_space<vmem>>, %arg3: memref<4x1xf32, #tpu.memory_space<vmem>>, %arg4: memref<1x4x1xf32, #tpu.memory_space<vmem>>, %arg5: memref<512x512xbf16, #tpu.memory_space<vmem>>, %arg6: memref<1x1x1xf32, #tpu.memory_space<vmem>>) attributes {dimension_semantics = [#tpu.dimension_semantics<parallel>], iteration_bounds = array<i64: 1>, scalar_prefetch = 0 : i64, scratch_operands = 0 : i64, tpu.core_type = #tpu.core_type<tc>, window_params = [{transform_indices = @transform_0, window_bounds = array<i64: 4, 512>}, {transform_indices = @transform_1, window_bounds = array<i64: 4, 512>}, {pipeline_mode = #tpu.pipeline_mode<synchronous>, transform_indices = @transform_2, window_bounds = array<i64: 4, 1>}, {transform_indices = @transform_3, window_bounds = array<i64: 1, 4, 1>}, {pipeline_mode = #tpu.pipeline_mode<synchronous>, transform_indices = @transform_4, window_bounds = array<i64: 512, 512>}, {transform_indices = @transform_5, window_bounds = array<i64: 1, 1, 1>}]} {
    %c0 = arith.constant 0 : index
    %c0_0 = arith.constant 0 : index
    %0 = vector.load %arg3[%c0, %c0_0] : memref<4x1xf32, #tpu.memory_space<vmem>>, vector<4x1xf32>
    %c0_1 = arith.constant 0 : index
    %c0_2 = arith.constant 0 : index
    %1 = vector.load %arg5[%c0_1, %c0_2] : memref<512x512xbf16, #tpu.memory_space<vmem>>, vector<512x512xbf16>
    %c512_i32 = arith.constant 512 : i32
    %2 = arith.muli %arg0, %c512_i32 : i32
    %c0_3 = arith.constant 0 : index
    %c0_4 = arith.constant 0 : index
    %c0_5 = arith.constant 0 : index
    %3 = vector.load %arg4[%c0_3, %c0_4, %c0_5] : memref<1x4x1xf32, #tpu.memory_space<vmem>>, vector<1x4x1xf32>
    %4 = vector.shape_cast %3 : vector<1x4x1xf32> to vector<4x1xf32>
    %cst = arith.constant 0.000000e+00 : f32
    %5 = vector.broadcast %cst : f32 to vector<4x1xf32>
    %c0_i32 = arith.constant 0 : i32
    %c512_i32_6 = arith.constant 512 : i32
    %6 = arith.muli %c0_i32, %c512_i32_6 : i32
    %7 = tpu.assume_multiple %6, 512 : i32
    %c0_7 = arith.constant 0 : index
    %8 = arith.index_cast %7 : i32 to index
    %9 = vector.load %arg1[%c0_7, %8] : memref<4x512xf32, #tpu.memory_space<vmem>>, vector<4x512xf32>
    %c0_8 = arith.constant 0 : index
    %10 = arith.index_cast %7 : i32 to index
    %11 = vector.load %arg2[%c0_8, %10] : memref<4x512xbf16, #tpu.memory_space<vmem>>, vector<4x512xbf16>
    %12 = arith.extf %11 : vector<4x512xbf16> to vector<4x512xf32>
    %cst_9 = arith.constant dense<0.000000e+00> : vector<4x512xf32>
    %13 = tpu.matmul %11, %1, %cst_9 {dimension_numbers = #tpu.dot_dimension_numbers<[1], [0], [0], [1], [0, 0, 1, 1], [], []>} : vector<4x512xbf16>, vector<512x512xbf16>, vector<4x512xf32> -> vector<4x512xf32>
    %14 = vector.broadcast %4 : vector<4x1xf32> to vector<4x512xf32>
    %15 = arith.addf %13, %14 : vector<4x512xf32>
    %16 = arith.addi %2, %7 : i32
    %17 = tpu.iota {dimensions = array<i32: 1>} : vector<4x512xi32>
    %18 = vector.broadcast %16 : i32 to vector<4x512xi32>
    %19 = arith.addi %18, %17 : vector<4x512xi32>
    %20 = arith.sitofp %19 : vector<4x512xi32> to vector<4x512xf32>
    %c0_i32_10 = arith.constant 0 : i32
    %21 = vector.broadcast %c0_i32_10 : i32 to vector<4x512xi32>
    %22 = arith.cmpi eq, %19, %21 : vector<4x512xi32>
    %cst_11 = arith.constant 1.000000e+00 : f32
    %23 = vector.broadcast %cst_11 : f32 to vector<4x512xf32>
    %24 = arith.addf %20, %23 : vector<4x512xf32>
    %25 = vector.broadcast %0 : vector<4x1xf32> to vector<4x512xf32>
    %26 = arith.addf %25, %24 : vector<4x512xf32>
    %27 = arith.subf %26, %15 : vector<4x512xf32>
    %28 = vector.broadcast %0 : vector<4x1xf32> to vector<4x512xf32>
    %29 = arith.subf %28, %15 : vector<4x512xf32>
    %30 = tpu.reciprocal %27 : vector<4x512xf32> -> vector<4x512xf32>
    %31 = arith.mulf %29, %30 : vector<4x512xf32>
    %cst_12 = arith.constant 1.000000e+00 : f32
    %32 = vector.broadcast %cst_12 : f32 to vector<4x512xf32>
    %33 = arith.subf %32, %31 : vector<4x512xf32>
    %34 = arith.subf %15, %12 : vector<4x512xf32>
    %35 = vector.broadcast %0 : vector<4x1xf32> to vector<4x512xf32>
    %36 = arith.addf %35, %20 : vector<4x512xf32>
    %37 = arith.subf %36, %34 : vector<4x512xf32>
    %cst_13 = arith.constant 1.000000e+00 : f32
    %38 = vector.broadcast %cst_13 : f32 to vector<4x512xf32>
    %39 = arith.select %22, %38, %37 : vector<4x512xi1>, vector<4x512xf32>
    %40 = vector.broadcast %0 : vector<4x1xf32> to vector<4x512xf32>
    %41 = arith.subf %40, %34 : vector<4x512xf32>
    %42 = tpu.reciprocal %39 : vector<4x512xf32> -> vector<4x512xf32>
    %43 = arith.mulf %41, %42 : vector<4x512xf32>
    %cst_14 = arith.constant 1.000000e+00 : f32
    %44 = vector.broadcast %cst_14 : f32 to vector<4x512xf32>
    %45 = arith.subf %44, %43 : vector<4x512xf32>
    %cst_15 = arith.constant 0.000000e+00 : f32
    %46 = vector.broadcast %cst_15 : f32 to vector<4x512xf32>
    %47 = arith.select %22, %46, %45 : vector<4x512xi1>, vector<4x512xf32>
    %48 = arith.subf %33, %47 : vector<4x512xf32>
    %49 = arith.mulf %9, %48 : vector<4x512xf32>
    %cst_16 = arith.constant dense<0.000000e+00> : vector<4xf32>
    %50 = vector.multi_reduction <add>, %49, %cst_16 [1] : vector<4x512xf32> to vector<4xf32>
    %51 = vector.shape_cast %50 : vector<4xf32> to vector<4x1xf32>
    %52 = arith.addf %5, %51 : vector<4x1xf32>
    %53 = vector.extract_strided_slice %13 {offsets = [0, 511], sizes = [4, 1], strides = [1, 1]} : vector<4x512xf32> to vector<4x1xf32>
    %54 = arith.addf %4, %53 : vector<4x1xf32>
    %c1_i32 = arith.constant 1 : i32
    %cst_17 = arith.constant 0.000000e+00 : f32
    %55 = vector.broadcast %cst_17 : f32 to vector<4x1xf32>
    %56 = arith.cmpf ogt, %0, %55 : vector<4x1xf32>
    %57 = arith.extui %56 : vector<4x1xi1> to vector<4x1xi32>
    %58 = arith.sitofp %57 : vector<4x1xi32> to vector<4x1xf32>
    %59 = arith.mulf %52, %58 : vector<4x1xf32>
    %cst_18 = arith.constant dense<0.000000e+00> : vector<1xf32>
    %60 = vector.multi_reduction <add>, %59, %cst_18 [0] : vector<4x1xf32> to vector<1xf32>
    %61 = vector.shape_cast %60 : vector<1xf32> to vector<1x1xf32>
    %c0_19 = arith.constant 0 : index
    %c0_20 = arith.constant 0 : index
    %c0_21 = arith.constant 0 : index
    %62 = vector.load %arg6[%c0_19, %c0_20, %c0_21] : memref<1x1x1xf32, #tpu.memory_space<vmem>>, vector<1x1x1xf32>
    %63 = vector.shape_cast %62 : vector<1x1x1xf32> to vector<1x1xf32>
    %64 = vector.shape_cast %61 : vector<1x1xf32> to vector<1x1x1xf32>
    tpu.vector_store %arg6[%c0_19, %c0_20, %c0_21], %64 {strides = array<i32>} : memref<1x1x1xf32, #tpu.memory_space<vmem>>, vector<1x1x1xf32>,
    return
  }
  func.func @transform_0(%arg0: i32) -> (i32, i32) {
    %c0_i32 = arith.constant 0 : i32
    %c0_i32_0 = arith.constant 0 : i32
    return %c0_i32, %arg0 : i32, i32
  }
  func.func @transform_1(%arg0: i32) -> (i32, i32) {
    %c0_i32 = arith.constant 0 : i32
    %c0_i32_0 = arith.constant 0 : i32
    return %c0_i32, %arg0 : i32, i32
  }
  func.func @transform_2(%arg0: i32) -> (i32, i32) {
    %c0_i32 = arith.constant 0 : i32
    %c0_i32_0 = arith.constant 0 : i32
    %c0_i32_1 = arith.constant 0 : i32
    return %c0_i32, %c0_i32_0 : i32, i32
  }
  func.func @transform_3(%arg0: i32) -> (i32, i32, i32) {
    %c0_i32 = arith.constant 0 : i32
    %c0_i32_0 = arith.constant 0 : i32
    %c0_i32_1 = arith.constant 0 : i32
    return %arg0, %c0_i32, %c0_i32_0 : i32, i32, i32
  }
  func.func @transform_4(%arg0: i32) -> (i32, i32) {
    %c0_i32 = arith.constant 0 : i32
    %c0_i32_0 = arith.constant 0 : i32
    %c0_i32_1 = arith.constant 0 : i32
    return %c0_i32, %c0_i32_0 : i32, i32
  }
  func.func @transform_5(%arg0: i32) -> (i32, i32, i32) {
    %c0_i32 = arith.constant 0 : i32
    %c0_i32_0 = arith.constant 0 : i32
    %c0_i32_1 = arith.constant 0 : i32
    return %arg0, %c0_i32, %c0_i32_0 : i32, i32, i32
  }
}

</mosaic_0001>

<llo_original>
// kernel: lovasz_softmax_loss.2
$region0: #{lovasz_softmax_loss.2}
  #allocation0 [shape = 'u32[]', space=smem, size = 0x4, offset = 0x4, fixed_abs, tag = 'smem constant byte address 0x4 - core index']
  #allocation1 [shape = 'u32[72,128]{1,0:T(1,128)}', space=vmem, size = 0x9000, scoped, tag = 'internal scratch']
  %s0 = inlined_call_operand.vmem [shape: f32[4,512], index: 0, kind: input, shape index: {}]
  %s1 = inlined_call_operand.vmem [shape: s32[1,512], index: 1, kind: input, shape index: {}]
  %s2 = inlined_call_operand.vmem [shape: s32[4,512], index: 2, kind: output, shape index: {}]
  %s3 = sld [smem:[#allocation0]]
  $region18: #{lovasz_softmax_loss.2} parent=0
    _
  %s5 = ssub.s32 1, %s3
  %s6 = scalar_select 0, %s5, %s3
  // Predicated region
  $region2: #{lovasz_softmax_loss.2} parent=0 // pred_check
    _
  $region3: #{lovasz_softmax_loss.2} parent=0 // pred_check_branch
    %8 = sbr.rel (0) target = $region5
  $region4: #{lovasz_softmax_loss.2} parent=0 // pred_region
    _
  $region5: #{lovasz_softmax_loss.2} parent=0 // pred_fallthru
    _
  // Predicated region
  $region6: #{lovasz_softmax_loss.2} parent=0 // pred_check
    _
  $region7: #{lovasz_softmax_loss.2} parent=0 // pred_check_branch
    %10 = sbr.rel (0) target = $region9
  $region8: #{lovasz_softmax_loss.2} parent=0 // pred_region
    _
  $region9: #{lovasz_softmax_loss.2} parent=0 // pred_fallthru
    _
  %v11 = vld [vmem:[%s0] sm:$0xff]
  %v12 = vld [vmem:[%s0 + $0x8] sm:$0xff]
  %v13 = vld [vmem:[%s1] sm:$0xf]
  %16 = vst [vmem:[#allocation1] ss:$2 sm:$0xff] %v11
  %s17 = scalar_lea.vmem [#allocation1], 16
  %18 = vst [vmem:[%s17] ss:$2 sm:$0xff] %v12
  %v19 = vld.sshfl [vmem:[#allocation1] sm:$0xff pattern:$0x75316420]
  %v20 = vld.sshfl [vmem:[#allocation1 + $0x8] sm:$0xff pattern:$0x75316420]
  %v21 = vld.sshfl [vmem:[#allocation1 + $0x10] sm:$0xff pattern:$0x75316420]
  %v22 = vld.sshfl [vmem:[#allocation1 + $0x18] sm:$0xff pattern:$0x75316420]
  %vm27 = vcmask 1043456
  %v28 = vsel %vm27, %v19, -inf
  %v29 = vrot.slane %v28, 4
  %v30 = vmax.f32 %v28, %v29
  %v31 = vrot.slane %v30, 2
  %v32 = vmax.f32 %v30, %v31
  %v33 = vrot.slane %v32, 1
  %v34 = vmax.f32 %v32, %v33
  %v35 = vsel %vm27, %v20, -inf
  %v36 = vrot.slane %v35, 4
  %v37 = vmax.f32 %v35, %v36
  %v38 = vrot.slane %v37, 2
  %v39 = vmax.f32 %v37, %v38
  %v40 = vrot.slane %v39, 1
  %v41 = vmax.f32 %v39, %v40
  %v42 = vsel %vm27, %v21, -inf
  %v43 = vrot.slane %v42, 4
  %v44 = vmax.f32 %v42, %v43
  %v45 = vrot.slane %v44, 2
  %v46 = vmax.f32 %v44, %v45
  %v47 = vrot.slane %v46, 1
  %v48 = vmax.f32 %v46, %v47
  %v49 = vsel %vm27, %v22, -inf
  %v50 = vrot.slane %v49, 4
  %v51 = vmax.f32 %v49, %v50
  %v52 = vrot.slane %v51, 2
  %v53 = vmax.f32 %v51, %v52
  %v54 = vrot.slane %v53, 1
  %v55 = vmax.f32 %v53, %v54
  %v60 = vrot.slane %v41, 4
  %v61 = vrot.slane %v55, 4
  %v62 = vsel %vm27, %v34, %v60
  %v63 = vsel %vm27, %v48, %v61
  %v66 = vsub.f32 %v11, %v62
  %v67 = vsub.f32 %v12, %v63
  %v68 = vmul.f32 %v66, 1.442695
  %v69 = vpow.pop %v68
  %v70 = vmul.f32 %v67, 1.442695
  %v71 = vpow.pop %v70
  %74 = vst [vmem:[#allocation1] ss:$2 sm:$0xff] %v69
  %s75 = scalar_lea.vmem [#allocation1], 16
  %76 = vst [vmem:[%s75] ss:$2 sm:$0xff] %v71
  %v77 = vld.sshfl [vmem:[#allocation1] sm:$0xff pattern:$0x75316420]
  %v78 = vld.sshfl [vmem:[#allocation1 + $0x8] sm:$0xff pattern:$0x75316420]
  %v79 = vld.sshfl [vmem:[#allocation1 + $0x10] sm:$0xff pattern:$0x75316420]
  %v80 = vld.sshfl [vmem:[#allocation1 + $0x18] sm:$0xff pattern:$0x75316420]
  %v85 = vsel %vm27, %v77, 0.0
  %v86 = vrot.slane %v85, 4
  %v87 = vadd.f32 %v85, %v86
  %v88 = vrot.slane %v87, 2
  %v89 = vadd.f32 %v87, %v88
  %v90 = vrot.slane %v89, 1
  %v91 = vadd.f32 %v89, %v90
  %v92 = vsel %vm27, %v78, 0.0
  %v93 = vrot.slane %v92, 4
  %v94 = vadd.f32 %v92, %v93
  %v95 = vrot.slane %v94, 2
  %v96 = vadd.f32 %v94, %v95
  %v97 = vrot.slane %v96, 1
  %v98 = vadd.f32 %v96, %v97
  %v99 = vsel %vm27, %v79, 0.0
  %v100 = vrot.slane %v99, 4
  %v101 = vadd.f32 %v99, %v100
  %v102 = vrot.slane %v101, 2
  %v103 = vadd.f32 %v101, %v102
  %v104 = vrot.slane %v103, 1
  %v105 = vadd.f32 %v103, %v104
  %v106 = vsel %vm27, %v80, 0.0
  %v107 = vrot.slane %v106, 4
  %v108 = vadd.f32 %v106, %v107
  %v109 = vrot.slane %v108, 2
  %v110 = vadd.f32 %v108, %v109
  %v111 = vrot.slane %v110, 1
  %v112 = vadd.f32 %v110, %v111
  %v113 = vrcp.pop %v91
  %v114 = vmul.f32 %v91, %v113
  %v115 = vsub.f32 1.0, %v114
  %v116 = vmul.f32 %v113, %v115
  %v117 = vadd.f32 %v113, %v116
  %vm118 = vweird.f32 %v91
  %vm119 = vweird.f32 %v113
  %vm120 = vmor %vm118, %vm119
  %v121 = vsel %vm120, %v113, %v117
  %v122 = vand.u32 2147483647, %v91
  %vm123 = vcmp.eq.f32.partialorder %v122, 8.507059e+37
  %v124 = vand.u32 %v91, 2147483648
  %v125 = vor.u32 1.1754944e-38, %v124
  %v126 = vsel %vm123, %v125, %v121
  %v127 = vrcp.pop %v98
  %v128 = vmul.f32 %v98, %v127
  %v129 = vsub.f32 1.0, %v128
  %v130 = vmul.f32 %v127, %v129
  %v131 = vadd.f32 %v127, %v130
  %vm132 = vweird.f32 %v98
  %vm133 = vweird.f32 %v127
  %vm134 = vmor %vm132, %vm133
  %v135 = vsel %vm134, %v127, %v131
  %v136 = vand.u32 2147483647, %v98
  %vm137 = vcmp.eq.f32.partialorder %v136, 8.507059e+37
  %v138 = vand.u32 %v98, 2147483648
  %v139 = vor.u32 1.1754944e-38, %v138
  %v140 = vsel %vm137, %v139, %v135
  %v141 = vrcp.pop %v105
  %v142 = vmul.f32 %v105, %v141
  %v143 = vsub.f32 1.0, %v142
  %v144 = vmul.f32 %v141, %v143
  %v145 = vadd.f32 %v141, %v144
  %vm146 = vweird.f32 %v105
  %vm147 = vweird.f32 %v141
  %vm148 = vmor %vm146, %vm147
  %v149 = vsel %vm148, %v141, %v145
  %v150 = vand.u32 2147483647, %v105
  %vm151 = vcmp.eq.f32.partialorder %v150, 8.507059e+37
  %v152 = vand.u32 %v105, 2147483648
  %v153 = vor.u32 1.1754944e-38, %v152
  %v154 = vsel %vm151, %v153, %v149
  %v155 = vrcp.pop %v112
  %v156 = vmul.f32 %v112, %v155
  %v157 = vsub.f32 1.0, %v156
  %v158 = vmul.f32 %v155, %v157
  %v159 = vadd.f32 %v155, %v158
  %vm160 = vweird.f32 %v112
  %vm161 = vweird.f32 %v155
  %vm162 = vmor %vm160, %vm161
  %v163 = vsel %vm162, %v155, %v159
  %v164 = vand.u32 2147483647, %v112
  %vm165 = vcmp.eq.f32.partialorder %v164, 8.507059e+37
  %v166 = vand.u32 %v112, 2147483648
  %v167 = vor.u32 1.1754944e-38, %v166
  %v168 = vsel %vm165, %v167, %v163
  %v173 = vrot.slane %v140, 4
  %v174 = vrot.slane %v168, 4
  %v175 = vsel %vm27, %v126, %v173
  %v176 = vsel %vm27, %v154, %v174
  %v179 = vmul.f32 %v69, %v175
  %v180 = vmul.f32 %v71, %v176
  %vm181 = vcmp.ne.s32.totalorder %v13, 255
  %v182 = vlaneseq
  %v183 = vshrl.u32 %v182, 7
  %v184 = vperm.slane %v13, 0
  %v185 = vperm.slane %v13, 1
  %v186 = vperm.slane %v13, 2
  %v187 = vperm.slane %v13, 3
  %vm188 = vcmp.eq.s32.totalorder %v184, %v183
  %vm189 = vcmp.eq.s32.totalorder %v185, %v183
  %vm190 = vcmp.eq.s32.totalorder %v186, %v183
  %vm191 = vcmp.eq.s32.totalorder %v187, %v183
  %v192 = vsel %vm181, 1, 0
  %v193 = vperm.slane %v192, 0
  %v194 = vperm.slane %v192, 1
  %v195 = vperm.slane %v192, 2
  %v196 = vperm.slane %v192, 3
  %vm197 = vcmp.eq.s32.totalorder %v193, 1
  %vm198 = vcmp.eq.s32.totalorder %v194, 1
  %vm199 = vcmp.eq.s32.totalorder %v195, 1
  %vm200 = vcmp.eq.s32.totalorder %v196, 1
  %vm201 = vmand %vm188, %vm197
  %vm202 = vmand %vm189, %vm198
  %vm203 = vmand %vm190, %vm199
  %vm204 = vmand %vm191, %vm200
  %v205 = vsel %vm201, 1, 0
  %v206 = vsel %vm202, 1, 0
  %v207 = vsel %vm203, 1, 0
  %v208 = vsel %vm204, 1, 0
  %v209 = vcvt.s32.f32 %v205
  %v210 = vcvt.s32.f32 %v206
  %v211 = vcvt.s32.f32 %v207
  %v212 = vcvt.s32.f32 %v208
  %215 = vst [vmem:[#allocation1] ss:$2 sm:$0xff] %v179
  %s216 = scalar_lea.vmem [#allocation1], 16
  %217 = vst [vmem:[%s216] ss:$2 sm:$0xff] %v180
  %v218 = vld.sshfl [vmem:[#allocation1] sm:$0xff pattern:$0x75316420]
  %v219 = vld.sshfl [vmem:[#allocation1 + $0x8] sm:$0xff pattern:$0x75316420]
  %v220 = vld.sshfl [vmem:[#allocation1 + $0x10] sm:$0xff pattern:$0x75316420]
  %v221 = vld.sshfl [vmem:[#allocation1 + $0x18] sm:$0xff pattern:$0x75316420]
  %v226 = vsub.f32 %v209, %v218
  %v227 = vsub.f32 %v210, %v219
  %v228 = vsub.f32 %v211, %v220
  %v229 = vsub.f32 %v212, %v221
  %v230 = vand.u32 2147483647, %v226
  %v231 = vand.u32 2147483647, %v227
  %v232 = vand.u32 2147483647, %v228
  %v233 = vand.u32 2147483647, %v229
  %v234 = vsel %vm197, %v230, 0.0
  %v235 = vsel %vm198, %v231, 0.0
  %v236 = vsel %vm199, %v232, 0.0
  %v237 = vsel %vm200, %v233, 0.0
  %v242 = vshll.u32 %v234, 1
  %v243 = vshll.u32 %v235, 1
  %v244 = vshll.u32 %v236, 1
  %v245 = vshll.u32 %v237, 1
  %v246 = vor.u32 %v242, %v205
  %v247 = vor.u32 %v243, %v206
  %v248 = vor.u32 %v244, %v207
  %v249 = vor.u32 %v245, %v208
  %v250 = vsub.s32 0, %v246
  %v251 = vsub.s32 0, %v247
  %v252 = vsub.s32 0, %v248
  %v253 = vsub.s32 0, %v249
  %v254 = vrot.slane %v251, 4
  %v255 = vrot.slane %v253, 4
  %v256 = vsel %vm27, %v250, %v254
  %v257 = vsel %vm27, %v252, %v255
  %258 = vst [vmem:[%s2] sm:$0xff] %v256
  %259 = vst [vmem:[%s2 + $0x8] sm:$0xff] %v257
  // Predicated region
  $region10: #{lovasz_softmax_loss.2} parent=0 // pred_check
    _
  $region11: #{lovasz_softmax_loss.2} parent=0 // pred_check_branch
    %261 = sbr.rel (0) target = $region13
  $region12: #{lovasz_softmax_loss.2} parent=0 // pred_region
    _
  $region13: #{lovasz_softmax_loss.2} parent=0 // pred_fallthru
    _
  // Predicated region
  $region14: #{lovasz_softmax_loss.2} parent=0 // pred_check
    _
  $region15: #{lovasz_softmax_loss.2} parent=0 // pred_check_branch
    %263 = sbr.rel (0) target = $region17
  $region16: #{lovasz_softmax_loss.2} parent=0 // pred_region
    _
  $region17: #{lovasz_softmax_loss.2} parent=0 // pred_fallthru
    _

// kernel: lovasz_softmax_loss.3
$region0: #{lovasz_softmax_loss.3}
  #allocation0 [shape = 'u32[]', space=smem, size = 0x4, offset = 0x4, fixed_abs, tag = 'smem constant byte address 0x4 - core index']
  #allocation1 [shape = 'u32[72,128]{1,0:T(1,128)}', space=vmem, size = 0x9000, scoped, tag = 'internal scratch']
  %s0 = inlined_call_operand.vmem [shape: f32[4,512], index: 0, kind: input, shape index: {}]
  %s1 = inlined_call_operand.vmem [shape: bf16[4,512], index: 1, kind: input, shape index: {}]
  %s2 = inlined_call_operand.vmem [shape: f32[4,1], index: 2, kind: input, shape index: {}]
  %s3 = inlined_call_operand.vmem [shape: f32[1,4,1], index: 3, kind: input, shape index: {}]
  %s4 = inlined_call_operand.vmem [shape: bf16[512,512], index: 4, kind: input, shape index: {}]
  %s5 = inlined_call_operand.hbm [shape: f32[1,1,1], index: 5, kind: output, shape index: {}]
  %s6 = sld [smem:[#allocation0]]
  $region30: #{lovasz_softmax_loss.3} parent=0
    _
  %s8 = ssub.s32 1, %s6
  %s9 = scalar_select 0, %s8, %s6
  $region1: #{lovasz_softmax_loss.3} parent=0
    #allocation2 [shape = 'u8[512]{0}', space=vmem, size = 0x400, scoped, tag = 'output window, operand 0, single buffered']
    #allocation3 [shape = 's32[1]{0}', space=sflag, size = 0x4, scoped, tag = 'scoped memory for lovasz_softmax_loss.3']
    %10 = vsyncpa [#allocation3], 0
    // Predicated region
    $region2: #{lovasz_softmax_loss.3} parent=1 // pred_check
      _
    $region3: #{lovasz_softmax_loss.3} parent=1 // pred_check_branch
      %12 = sbr.rel (0) target = $region5
    $region4: #{lovasz_softmax_loss.3} parent=1 // pred_region
      _
    $region5: #{lovasz_softmax_loss.3} parent=1 // pred_fallthru
      _
    // Predicated region
    $region6: #{lovasz_softmax_loss.3} parent=1 // pred_check
      _
    $region7: #{lovasz_softmax_loss.3} parent=1 // pred_check_branch
      %14 = sbr.rel (0) target = $region9
    $region8: #{lovasz_softmax_loss.3} parent=1 // pred_region
      _
    $region9: #{lovasz_softmax_loss.3} parent=1 // pred_fallthru
      _
    // Predicated region
    $region10: #{lovasz_softmax_loss.3} parent=1 // pred_check
      _
    $region11: #{lovasz_softmax_loss.3} parent=1 // pred_check_branch
      %16 = sbr.rel (0) target = $region13
    $region12: #{lovasz_softmax_loss.3} parent=1 // pred_region
      _
    $region13: #{lovasz_softmax_loss.3} parent=1 // pred_fallthru
      _
    // Predicated region
    $region14: #{lovasz_softmax_loss.3} parent=1 // pred_check
      _
    $region15: #{lovasz_softmax_loss.3} parent=1 // pred_check_branch
      %18 = sbr.rel (0) target = $region17
    $region16: #{lovasz_softmax_loss.3} parent=1 // pred_region
      _
    $region17: #{lovasz_softmax_loss.3} parent=1 // pred_fallthru
      _
    // Predicated region
    $region18: #{lovasz_softmax_loss.3} parent=1 // pred_check
      _
    $region19: #{lovasz_softmax_loss.3} parent=1 // pred_check_branch
      %20 = sbr.rel (0) target = $region21
    $region20: #{lovasz_softmax_loss.3} parent=1 // pred_region
      _
    $region21: #{lovasz_softmax_loss.3} parent=1 // pred_fallthru
      _
    %v21 = vld [vmem:[%s2] sm:$0xf]
    %v22 = vld [vmem:[%s4] sm:$0xff]
    %v23 = vld [vmem:[%s4 + $0x8] sm:$0xff]
    %v24 = vld [vmem:[%s4 + $0x10] sm:$0xff]
    %v25 = vld [vmem:[%s4 + $0x18] sm:$0xff]
    %v26 = vld [vmem:[%s4 + $0x20] sm:$0xff]
    %v27 = vld [vmem:[%s4 + $0x28] sm:$0xff]
    %v28 = vld [vmem:[%s4 + $0x30] sm:$0xff]
    %v29 = vld [vmem:[%s4 + $0x38] sm:$0xff]
    %v30 = vld [vmem:[%s4 + $0x40] sm:$0xff]
    %v31 = vld [vmem:[%s4 + $0x48] sm:$0xff]
    %v32 = vld [vmem:[%s4 + $0x50] sm:$0xff]
    %v33 = vld [vmem:[%s4 + $0x58] sm:$0xff]
    %v34 = vld [vmem:[%s4 + $0x60] sm:$0xff]
    %v35 = vld [vmem:[%s4 + $0x68] sm:$0xff]
    %v36 = vld [vmem:[%s4 + $0x70] sm:$0xff]
    %v37 = vld [vmem:[%s4 + $0x78] sm:$0xff]
    %v38 = vld [vmem:[%s4 + $0x80] sm:$0xff]
    %v39 = vld [vmem:[%s4 + $0x88] sm:$0xff]
    %v40 = vld [vmem:[%s4 + $0x90] sm:$0xff]
    %v41 = vld [vmem:[%s4 + $0x98] sm:$0xff]
    %v42 = vld [vmem:[%s4 + $0xa0] sm:$0xff]
    %v43 = vld [vmem:[%s4 + $0xa8] sm:$0xff]
    %v44 = vld [vmem:[%s4 + $0xb0] sm:$0xff]
    %v45 = vld [vmem:[%s4 + $0xb8] sm:$0xff]
    %v46 = vld [vmem:[%s4 + $0xc0] sm:$0xff]
    %v47 = vld [vmem:[%s4 + $0xc8] sm:$0xff]
    %v48 = vld [vmem:[%s4 + $0xd0] sm:$0xff]
    %v49 = vld [vmem:[%s4 + $0xd8] sm:$0xff]
    %v50 = vld [vmem:[%s4 + $0xe0] sm:$0xff]
    %v51 = vld [vmem:[%s4 + $0xe8] sm:$0xff]
    %v52 = vld [vmem:[%s4 + $0xf0] sm:$0xff]
    %v53 = vld [vmem:[%s4 + $0xf8] sm:$0xff]
    %v54 = vld [vmem:[%s4 + $0x100] sm:$0xff]
    %v55 = vld [vmem:[%s4 + $0x108] sm:$0xff]
    %v56 = vld [vmem:[%s4 + $0x110] sm:$0xff]
    %v57 = vld [vmem:[%s4 + $0x118] sm:$0xff]
    %v58 = vld [vmem:[%s4 + $0x120] sm:$0xff]
    %v59 = vld [vmem:[%s4 + $0x128] sm:$0xff]
    %v60 = vld [vmem:[%s4 + $0x130] sm:$0xff]
    %v61 = vld [vmem:[%s4 + $0x138] sm:$0xff]
    %v62 = vld [vmem:[%s4 + $0x140] sm:$0xff]
    %v63 = vld [vmem:[%s4 + $0x148] sm:$0xff]
    %v64 = vld [vmem:[%s4 + $0x150] sm:$0xff]
    %v65 = vld [vmem:[%s4 + $0x158] sm:$0xff]
    %v66 = vld [vmem:[%s4 + $0x160] sm:$0xff]
    %v67 = vld [vmem:[%s4 + $0x168] sm:$0xff]
    %v68 = vld [vmem:[%s4 + $0x170] sm:$0xff]
    %v69 = vld [vmem:[%s4 + $0x178] sm:$0xff]
    %v70 = vld [vmem:[%s4 + $0x180] sm:$0xff]
    %v71 = vld [vmem:[%s4 + $0x188] sm:$0xff]
    %v72 = vld [vmem:[%s4 + $0x190] sm:$0xff]
    %v73 = vld [vmem:[%s4 + $0x198] sm:$0xff]
    %v74 = vld [vmem:[%s4 + $0x1a0] sm:$0xff]
    %v75 = vld [vmem:[%s4 + $0x1a8] sm:$0xff]
    %v76 = vld [vmem:[%s4 + $0x1b0] sm:$0xff]
    %v77 = vld [vmem:[%s4 + $0x1b8] sm:$0xff]
    %v78 = vld [vmem:[%s4 + $0x1c0] sm:$0xff]
    %v79 = vld [vmem:[%s4 + $0x1c8] sm:$0xff]
    %v80 = vld [vmem:[%s4 + $0x1d0] sm:$0xff]
    %v81 = vld [vmem:[%s4 + $0x1d8] sm:$0xff]
    %v82 = vld [vmem:[%s4 + $0x1e0] sm:$0xff]
    %v83 = vld [vmem:[%s4 + $0x1e8] sm:$0xff]
    %v84 = vld [vmem:[%s4 + $0x1f0] sm:$0xff]
    %v85 = vld [vmem:[%s4 + $0x1f8] sm:$0xff]
    %v86 = vld [vmem:[%s4 + $0x200] sm:$0xff]
    %v87 = vld [vmem:[%s4 + $0x208] sm:$0xff]
    %v88 = vld [vmem:[%s4 + $0x210] sm:$0xff]
    %v89 = vld [vmem:[%s4 + $0x218] sm:$0xff]
    %v90 = vld [vmem:[%s4 + $0x220] sm:$0xff]
    %v91 = vld [vmem:[%s4 + $0x228] sm:$0xff]
    %v92 = vld [vmem:[%s4 + $0x230] sm:$0xff]
    %v93 = vld [vmem:[%s4 + $0x238] sm:$0xff]
    %v94 = vld [vmem:[%s4 + $0x240] sm:$0xff]
    %v95 = vld [vmem:[%s4 + $0x248] sm:$0xff]
    %v96 = vld [vmem:[%s4 + $0x250] sm:$0xff]
    %v97 = vld [vmem:[%s4 + $0x258] sm:$0xff]
    %v98 = vld [vmem:[%s4 + $0x260] sm:$0xff]
    %v99 = vld [vmem:[%s4 + $0x268] sm:$0xff]
    %v100 = vld [vmem:[%s4 + $0x270] sm:$0xff]
    %v101 = vld [vmem:[%s4 + $0x278] sm:$0xff]
    %v102 = vld [vmem:[%s4 + $0x280] sm:$0xff]
    %v103 = vld [vmem:[%s4 + $0x288] sm:$0xff]
    %v104 = vld [vmem:[%s4 + $0x290] sm:$0xff]
    %v105 = vld [vmem:[%s4 + $0x298] sm:$0xff]
    %v106 = vld [vmem:[%s4 + $0x2a0] sm:$0xff]
    %v107 = vld [vmem:[%s4 + $0x2a8] sm:$0xff]
    %v108 = vld [vmem:[%s4 + $0x2b0] sm:$0xff]
    %v109 = vld [vmem:[%s4 + $0x2b8] sm:$0xff]
    %v110 = vld [vmem:[%s4 + $0x2c0] sm:$0xff]
    %v111 = vld [vmem:[%s4 + $0x2c8] sm:$0xff]
    %v112 = vld [vmem:[%s4 + $0x2d0] sm:$0xff]
    %v113 = vld [vmem:[%s4 + $0x2d8] sm:$0xff]
    %v114 = vld [vmem:[%s4 + $0x2e0] sm:$0xff]
    %v115 = vld [vmem:[%s4 + $0x2e8] sm:$0xff]
    %v116 = vld [vmem:[%s4 + $0x2f0] sm:$0xff]
    %v117 = vld [vmem:[%s4 + $0x2f8] sm:$0xff]
    %v118 = vld [vmem:[%s4 + $0x300] sm:$0xff]
    %v119 = vld [vmem:[%s4 + $0x308] sm:$0xff]
    %v120 = vld [vmem:[%s4 + $0x310] sm:$0xff]
    %v121 = vld [vmem:[%s4 + $0x318] sm:$0xff]
    %v122 = vld [vmem:[%s4 + $0x320] sm:$0xff]
    %v123 = vld [vmem:[%s4 + $0x328] sm:$0xff]
    %v124 = vld [vmem:[%s4 + $0x330] sm:$0xff]
    %v125 = vld [vmem:[%s4 + $0x338] sm:$0xff]
    %v126 = vld [vmem:[%s4 + $0x340] sm:$0xff]
    %v127 = vld [vmem:[%s4 + $0x348] sm:$0xff]
    %v128 = vld [vmem:[%s4 + $0x350] sm:$0xff]
    %v129 = vld [vmem:[%s4 + $0x358] sm:$0xff]
    %v130 = vld [vmem:[%s4 + $0x360] sm:$0xff]
    %v131 = vld [vmem:[%s4 + $0x368] sm:$0xff]
    %v132 = vld [vmem:[%s4 + $0x370] sm:$0xff]
    %v133 = vld [vmem:[%s4 + $0x378] sm:$0xff]
    %v134 = vld [vmem:[%s4 + $0x380] sm:$0xff]
    %v135 = vld [vmem:[%s4 + $0x388] sm:$0xff]
    %v136 = vld [vmem:[%s4 + $0x390] sm:$0xff]
    %v137 = vld [vmem:[%s4 + $0x398] sm:$0xff]
    %v138 = vld [vmem:[%s4 + $0x3a0] sm:$0xff]
    %v139 = vld [vmem:[%s4 + $0x3a8] sm:$0xff]
    %v140 = vld [vmem:[%s4 + $0x3b0] sm:$0xff]
    %v141 = vld [vmem:[%s4 + $0x3b8] sm:$0xff]
    %v142 = vld [vmem:[%s4 + $0x3c0] sm:$0xff]
    %v143 = vld [vmem:[%s4 + $0x3c8] sm:$0xff]
    %v144 = vld [vmem:[%s4 + $0x3d0] sm:$0xff]
    %v145 = vld [vmem:[%s4 + $0x3d8] sm:$0xff]
    %v146 = vld [vmem:[%s4 + $0x3e0] sm:$0xff]
    %v147 = vld [vmem:[%s4 + $0x3e8] sm:$0xff]
    %v148 = vld [vmem:[%s4 + $0x3f0] sm:$0xff]
    %v149 = vld [vmem:[%s4 + $0x3f8] sm:$0xff]
    %s150 = smul.u32 0, 512
    %v151 = vld [vmem:[%s3] sm:$0xf]
    %v152 = vld [vmem:[%s0] sm:$0xff]
    %v153 = vld [vmem:[%s0 + $0x8] sm:$0xff]
    %v154 = vld [vmem:[%s1] sm:$0xff]
    %v155 = vunpack.c.l.bf16 %v154
    %v156 = vunpack.c.h.bf16 %v154
    %158 = vset.pattern.permute.xlu0 0
    %159 = vperm.xlu0 %158, %v151
    %v160 = vpop.permute.xlu0 %159
    %163 = vst [vmem:[#allocation1] ss:$4 sm:$0xff] %v154
    %v164 = vld.sshfl [vmem:[#allocation1] sm:$0xff pattern:$0x73625140]
    %v165 = vld.sshfl [vmem:[#allocation1 + $0x8] sm:$0xff pattern:$0x73625140]
    %v166 = vld.sshfl [vmem:[#allocation1 + $0x10] sm:$0xff pattern:$0x73625140]
    %v167 = vld.sshfl [vmem:[#allocation1 + $0x18] sm:$0xff pattern:$0x73625140]
    %v300 = vunpack.c.l.b16 %v22
    %v301 = vunpack.c.h.b16 %v22
    %v302 = vunpack.c.l.b16 %v23
    %v303 = vunpack.c.h.b16 %v23
    %v304 = vunpack.c.l.b16 %v24
    %v305 = vunpack.c.h.b16 %v24
    %v306 = vunpack.c.l.b16 %v25
    %v307 = vunpack.c.h.b16 %v25
    %v308 = vunpack.c.l.b16 %v26
    %v309 = vunpack.c.h.b16 %v26
    %v310 = vunpack.c.l.b16 %v27
    %v311 = vunpack.c.h.b16 %v27
    %v312 = vunpack.c.l.b16 %v28
    %v313 = vunpack.c.h.b16 %v28
    %v314 = vunpack.c.l.b16 %v29
    %v315 = vunpack.c.h.b16 %v29
    %v316 = vunpack.c.l.b16 %v30
    %v317 = vunpack.c.h.b16 %v30
    %v318 = vunpack.c.l.b16 %v31
    %v319 = vunpack.c.h.b16 %v31
    %v320 = vunpack.c.l.b16 %v32
    %v321 = vunpack.c.h.b16 %v32
    %v322 = vunpack.c.l.b16 %v33
    %v323 = vunpack.c.h.b16 %v33
    %v324 = vunpack.c.l.b16 %v34
    %v325 = vunpack.c.h.b16 %v34
    %v326 = vunpack.c.l.b16 %v35
    %v327 = vunpack.c.h.b16 %v35
    %v328 = vunpack.c.l.b16 %v36
    %v329 = vunpack.c.h.b16 %v36
    %v330 = vunpack.c.l.b16 %v37
    %v331 = vunpack.c.h.b16 %v37
    %v332 = vunpack.c.l.b16 %v38
    %v333 = vunpack.c.h.b16 %v38
    %v334 = vunpack.c.l.b16 %v39
    %v335 = vunpack.c.h.b16 %v39
    %v336 = vunpack.c.l.b16 %v40
    %v337 = vunpack.c.h.b16 %v40
    %v338 = vunpack.c.l.b16 %v41
    %v339 = vunpack.c.h.b16 %v41
    %v340 = vunpack.c.l.b16 %v42
    %v341 = vunpack.c.h.b16 %v42
    %v342 = vunpack.c.l.b16 %v43
    %v343 = vunpack.c.h.b16 %v43
    %v344 = vunpack.c.l.b16 %v44
    %v345 = vunpack.c.h.b16 %v44
    %v346 = vunpack.c.l.b16 %v45
    %v347 = vunpack.c.h.b16 %v45
    %v348 = vunpack.c.l.b16 %v46
    %v349 = vunpack.c.h.b16 %v46
    %v350 = vunpack.c.l.b16 %v47
    %v351 = vunpack.c.h.b16 %v47
    %v352 = vunpack.c.l.b16 %v48
    %v353 = vunpack.c.h.b16 %v48
    %v354 = vunpack.c.l.b16 %v49
    %v355 = vunpack.c.h.b16 %v49
    %v356 = vunpack.c.l.b16 %v50
    %v357 = vunpack.c.h.b16 %v50
    %v358 = vunpack.c.l.b16 %v51
    %v359 = vunpack.c.h.b16 %v51
    %v360 = vunpack.c.l.b16 %v52
    %v361 = vunpack.c.h.b16 %v52
    %v362 = vunpack.c.l.b16 %v53
    %v363 = vunpack.c.h.b16 %v53
    %v364 = vunpack.c.l.b16 %v54
    %v365 = vunpack.c.h.b16 %v54
    %v366 = vunpack.c.l.b16 %v55
    %v367 = vunpack.c.h.b16 %v55
    %v368 = vunpack.c.l.b16 %v56
    %v369 = vunpack.c.h.b16 %v56
    %v370 = vunpack.c.l.b16 %v57
    %v371 = vunpack.c.h.b16 %v57
    %v372 = vunpack.c.l.b16 %v58
    %v373 = vunpack.c.h.b16 %v58
    %v374 = vunpack.c.l.b16 %v59
    %v375 = vunpack.c.h.b16 %v59
    %v376 = vunpack.c.l.b16 %v60
    %v377 = vunpack.c.h.b16 %v60
    %v378 = vunpack.c.l.b16 %v61
    %v379 = vunpack.c.h.b16 %v61
    %v380 = vunpack.c.l.b16 %v62
    %v381 = vunpack.c.h.b16 %v62
    %v382 = vunpack.c.l.b16 %v63
    %v383 = vunpack.c.h.b16 %v63
    %v384 = vunpack.c.l.b16 %v64
    %v385 = vunpack.c.h.b16 %v64
    %v386 = vunpack.c.l.b16 %v65
    %v387 = vunpack.c.h.b16 %v65
    %v388 = vunpack.c.l.b16 %v66
    %v389 = vunpack.c.h.b16 %v66
    %v390 = vunpack.c.l.b16 %v67
    %v391 = vunpack.c.h.b16 %v67
    %v392 = vunpack.c.l.b16 %v68
    %v393 = vunpack.c.h.b16 %v68
    %v394 = vunpack.c.l.b16 %v69
    %v395 = vunpack.c.h.b16 %v69
    %v396 = vunpack.c.l.b16 %v70
    %v397 = vunpack.c.h.b16 %v70
    %v398 = vunpack.c.l.b16 %v71
    %v399 = vunpack.c.h.b16 %v71
    %v400 = vunpack.c.l.b16 %v72
    %v401 = vunpack.c.h.b16 %v72
    %v402 = vunpack.c.l.b16 %v73
    %v403 = vunpack.c.h.b16 %v73
    %v404 = vunpack.c.l.b16 %v74
    %v405 = vunpack.c.h.b16 %v74
    %v406 = vunpack.c.l.b16 %v75
    %v407 = vunpack.c.h.b16 %v75
    %v408 = vunpack.c.l.b16 %v76
    %v409 = vunpack.c.h.b16 %v76
    %v410 = vunpack.c.l.b16 %v77
    %v411 = vunpack.c.h.b16 %v77
    %v412 = vunpack.c.l.b16 %v78
    %v413 = vunpack.c.h.b16 %v78
    %v414 = vunpack.c.l.b16 %v79
    %v415 = vunpack.c.h.b16 %v79
    %v416 = vunpack.c.l.b16 %v80
    %v417 = vunpack.c.h.b16 %v80
    %v418 = vunpack.c.l.b16 %v81
    %v419 = vunpack.c.h.b16 %v81
    %v420 = vunpack.c.l.b16 %v82
    %v421 = vunpack.c.h.b16 %v82
    %v422 = vunpack.c.l.b16 %v83
    %v423 = vunpack.c.h.b16 %v83
    %v424 = vunpack.c.l.b16 %v84
    %v425 = vunpack.c.h.b16 %v84
    %v426 = vunpack.c.l.b16 %v85
    %v427 = vunpack.c.h.b16 %v85
    %v428 = vunpack.c.l.b16 %v86
    %v429 = vunpack.c.h.b16 %v86
    %v430 = vunpack.c.l.b16 %v87
    %v431 = vunpack.c.h.b16 %v87
    %v432 = vunpack.c.l.b16 %v88
    %v433 = vunpack.c.h.b16 %v88
    %v434 = vunpack.c.l.b16 %v89
    %v435 = vunpack.c.h.b16 %v89
    %v436 = vunpack.c.l.b16 %v90
    %v437 = vunpack.c.h.b16 %v90
    %v438 = vunpack.c.l.b16 %v91
    %v439 = vunpack.c.h.b16 %v91
    %v440 = vunpack.c.l.b16 %v92
    %v441 = vunpack.c.h.b16 %v92
    %v442 = vunpack.c.l.b16 %v93
    %v443 = vunpack.c.h.b16 %v93
    %v444 = vunpack.c.l.b16 %v94
    %v445 = vunpack.c.h.b16 %v94
    %v446 = vunpack.c.l.b16 %v95
    %v447 = vunpack.c.h.b16 %v95
    %v448 = vunpack.c.l.b16 %v96
    %v449 = vunpack.c.h.b16 %v96
    %v450 = vunpack.c.l.b16 %v97
    %v451 = vunpack.c.h.b16 %v97
    %v452 = vunpack.c.l.b16 %v98
    %v453 = vunpack.c.h.b16 %v98
    %v454 = vunpack.c.l.b16 %v99
    %v455 = vunpack.c.h.b16 %v99
    %v456 = vunpack.c.l.b16 %v100
    %v457 = vunpack.c.h.b16 %v100
    %v458 = vunpack.c.l.b16 %v101
    %v459 = vunpack.c.h.b16 %v101
    %v460 = vunpack.c.l.b16 %v102
    %v461 = vunpack.c.h.b16 %v102
    %v462 = vunpack.c.l.b16 %v103
    %v463 = vunpack.c.h.b16 %v103
    %v464 = vunpack.c.l.b16 %v104
    %v465 = vunpack.c.h.b16 %v104
    %v466 = vunpack.c.l.b16 %v105
    %v467 = vunpack.c.h.b16 %v105
    %v468 = vunpack.c.l.b16 %v106
    %v469 = vunpack.c.h.b16 %v106
    %v470 = vunpack.c.l.b16 %v107
    %v471 = vunpack.c.h.b16 %v107
    %v472 = vunpack.c.l.b16 %v108
    %v473 = vunpack.c.h.b16 %v108
    %v474 = vunpack.c.l.b16 %v109
    %v475 = vunpack.c.h.b16 %v109
    %v476 = vunpack.c.l.b16 %v110
    %v477 = vunpack.c.h.b16 %v110
    %v478 = vunpack.c.l.b16 %v111
    %v479 = vunpack.c.h.b16 %v111
    %v480 = vunpack.c.l.b16 %v112
    %v481 = vunpack.c.h.b16 %v112
    %v482 = vunpack.c.l.b16 %v113
    %v483 = vunpack.c.h.b16 %v113
    %v484 = vunpack.c.l.b16 %v114
    %v485 = vunpack.c.h.b16 %v114
    %v486 = vunpack.c.l.b16 %v115
    %v487 = vunpack.c.h.b16 %v115
    %v488 = vunpack.c.l.b16 %v116
    %v489 = vunpack.c.h.b16 %v116
    %v490 = vunpack.c.l.b16 %v117
    %v491 = vunpack.c.h.b16 %v117
    %v492 = vunpack.c.l.b16 %v118
    %v493 = vunpack.c.h.b16 %v118
    %v494 = vunpack.c.l.b16 %v119
    %v495 = vunpack.c.h.b16 %v119
    %v496 = vunpack.c.l.b16 %v120
    %v497 = vunpack.c.h.b16 %v120
    %v498 = vunpack.c.l.b16 %v121
    %v499 = vunpack.c.h.b16 %v121
    %v500 = vunpack.c.l.b16 %v122
    %v501 = vunpack.c.h.b16 %v122
    %v502 = vunpack.c.l.b16 %v123
    %v503 = vunpack.c.h.b16 %v123
    %v504 = vunpack.c.l.b16 %v124
    %v505 = vunpack.c.h.b16 %v124
    %v506 = vunpack.c.l.b16 %v125
    %v507 = vunpack.c.h.b16 %v125
    %v508 = vunpack.c.l.b16 %v126
    %v509 = vunpack.c.h.b16 %v126
    %v510 = vunpack.c.l.b16 %v127
    %v511 = vunpack.c.h.b16 %v127
    %v512 = vunpack.c.l.b16 %v128
    %v513 = vunpack.c.h.b16 %v128
    %v514 = vunpack.c.l.b16 %v129
    %v515 = vunpack.c.h.b16 %v129
    %v516 = vunpack.c.l.b16 %v130
    %v517 = vunpack.c.h.b16 %v130
    %v518 = vunpack.c.l.b16 %v131
    %v519 = vunpack.c.h.b16 %v131
    %v520 = vunpack.c.l.b16 %v132
    %v521 = vunpack.c.h.b16 %v132
    %v522 = vunpack.c.l.b16 %v133
    %v523 = vunpack.c.h.b16 %v133
    %v524 = vunpack.c.l.b16 %v134
    %v525 = vunpack.c.h.b16 %v134
    %v526 = vunpack.c.l.b16 %v135
    %v527 = vunpack.c.h.b16 %v135
    %v528 = vunpack.c.l.b16 %v136
    %v529 = vunpack.c.h.b16 %v136
    %v530 = vunpack.c.l.b16 %v137
    %v531 = vunpack.c.h.b16 %v137
    %v532 = vunpack.c.l.b16 %v138
    %v533 = vunpack.c.h.b16 %v138
    %v534 = vunpack.c.l.b16 %v139
    %v535 = vunpack.c.h.b16 %v139
    %v536 = vunpack.c.l.b16 %v140
    %v537 = vunpack.c.h.b16 %v140
    %v538 = vunpack.c.l.b16 %v141
    %v539 = vunpack.c.h.b16 %v141
    %v540 = vunpack.c.l.b16 %v142
    %v541 = vunpack.c.h.b16 %v142
    %v542 = vunpack.c.l.b16 %v143
    %v543 = vunpack.c.h.b16 %v143
    %v544 = vunpack.c.l.b16 %v144
    %v545 = vunpack.c.h.b16 %v144
    %v546 = vunpack.c.l.b16 %v145
    %v547 = vunpack.c.h.b16 %v145
    %v548 = vunpack.c.l.b16 %v146
    %v549 = vunpack.c.h.b16 %v146
    %v550 = vunpack.c.l.b16 %v147
    %v551 = vunpack.c.h.b16 %v147
    %v552 = vunpack.c.l.b16 %v148
    %v553 = vunpack.c.h.b16 %v148
    %v554 = vunpack.c.l.b16 %v149
    %v555 = vunpack.c.h.b16 %v149
    %v556 = vpack.c.b16 %v304, %v300
    %v557 = vpack.c.b16 %v305, %v301
    %v558 = vpack.c.b16 %v306, %v302
    %v559 = vpack.c.b16 %v307, %v303
    %v560 = vpack.c.b16 %v312, %v308
    %v561 = vpack.c.b16 %v313, %v309
    %v562 = vpack.c.b16 %v314, %v310
    %v563 = vpack.c.b16 %v315, %v311
    %v564 = vpack.c.b16 %v320, %v316
    %v565 = vpack.c.b16 %v321, %v317
    %v566 = vpack.c.b16 %v322, %v318
    %v567 = vpack.c.b16 %v323, %v319
    %v568 = vpack.c.b16 %v328, %v324
    %v569 = vpack.c.b16 %v329, %v325
    %v570 = vpack.c.b16 %v330, %v326
    %v571 = vpack.c.b16 %v331, %v327
    %v572 = vpack.c.b16 %v336, %v332
    %v573 = vpack.c.b16 %v337, %v333
    %v574 = vpack.c.b16 %v338, %v334
    %v575 = vpack.c.b16 %v339, %v335
    %v576 = vpack.c.b16 %v344, %v340
    %v577 = vpack.c.b16 %v345, %v341
    %v578 = vpack.c.b16 %v346, %v342
    %v579 = vpack.c.b16 %v347, %v343
    %v580 = vpack.c.b16 %v352, %v348
    %v581 = vpack.c.b16 %v353, %v349
    %v582 = vpack.c.b16 %v354, %v350
    %v583 = vpack.c.b16 %v355, %v351
    %v584 = vpack.c.b16 %v360, %v356
    %v585 = vpack.c.b16 %v361, %v357
    %v586 = vpack.c.b16 %v362, %v358
    %v587 = vpack.c.b16 %v363, %v359
    %v588 = vpack.c.b16 %v368, %v364
    %v589 = vpack.c.b16 %v369, %v365
    %v590 = vpack.c.b16 %v370, %v366
    %v591 = vpack.c.b16 %v371, %v367
    %v592 = vpack.c.b16 %v376, %v372
    %v593 = vpack.c.b16 %v377, %v373
    %v594 = vpack.c.b16 %v378, %v374
    %v595 = vpack.c.b16 %v379, %v375
    %v596 = vpack.c.b16 %v384, %v380
    %v597 = vpack.c.b16 %v385, %v381
    %v598 = vpack.c.b16 %v386, %v382
    %v599 = vpack.c.b16 %v387, %v383
    %v600 = vpack.c.b16 %v392, %v388
    %v601 = vpack.c.b16 %v393, %v389
    %v602 = vpack.c.b16 %v394, %v390
    %v603 = vpack.c.b16 %v395, %v391
    %v604 = vpack.c.b16 %v400, %v396
    %v605 = vpack.c.b16 %v401, %v397
    %v606 = vpack.c.b16 %v402, %v398
    %v607 = vpack.c.b16 %v403, %v399
    %v608 = vpack.c.b16 %v408, %v404
    %v609 = vpack.c.b16 %v409, %v405
    %v610 = vpack.c.b16 %v410, %v406
    %v611 = vpack.c.b16 %v411, %v407
    %v612 = vpack.c.b16 %v416, %v412
    %v613 = vpack.c.b16 %v417, %v413
    %v614 = vpack.c.b16 %v418, %v414
    %v615 = vpack.c.b16 %v419, %v415
    %v616 = vpack.c.b16 %v424, %v420
    %v617 = vpack.c.b16 %v425, %v421
    %v618 = vpack.c.b16 %v426, %v422
    %v619 = vpack.c.b16 %v427, %v423
    %v620 = vpack.c.b16 %v432, %v428
    %v621 = vpack.c.b16 %v433, %v429
    %v622 = vpack.c.b16 %v434, %v430
    %v623 = vpack.c.b16 %v435, %v431
    %v624 = vpack.c.b16 %v440, %v436
    %v625 = vpack.c.b16 %v441, %v437
    %v626 = vpack.c.b16 %v442, %v438
    %v627 = vpack.c.b16 %v443, %v439
    %v628 = vpack.c.b16 %v448, %v444
    %v629 = vpack.c.b16 %v449, %v445
    %v630 = vpack.c.b16 %v450, %v446
    %v631 = vpack.c.b16 %v451, %v447
    %v632 = vpack.c.b16 %v456, %v452
    %v633 = vpack.c.b16 %v457, %v453
    %v634 = vpack.c.b16 %v458, %v454
    %v635 = vpack.c.b16 %v459, %v455
    %v636 = vpack.c.b16 %v464, %v460
    %v637 = vpack.c.b16 %v465, %v461
    %v638 = vpack.c.b16 %v466, %v462
    %v639 = vpack.c.b16 %v467, %v463
    %v640 = vpack.c.b16 %v472, %v468
    %v641 = vpack.c.b16 %v473, %v469
    %v642 = vpack.c.b16 %v474, %v470
    %v643 = vpack.c.b16 %v475, %v471
    %v644 = vpack.c.b16 %v480, %v476
    %v645 = vpack.c.b16 %v481, %v477
    %v646 = vpack.c.b16 %v482, %v478
    %v647 = vpack.c.b16 %v483, %v479
    %v648 = vpack.c.b16 %v488, %v484
    %v649 = vpack.c.b16 %v489, %v485
    %v650 = vpack.c.b16 %v490, %v486
    %v651 = vpack.c.b16 %v491, %v487
    %v652 = vpack.c.b16 %v496, %v492
    %v653 = vpack.c.b16 %v497, %v493
    %v654 = vpack.c.b16 %v498, %v494
    %v655 = vpack.c.b16 %v499, %v495
    %v656 = vpack.c.b16 %v504, %v500
    %v657 = vpack.c.b16 %v505, %v501
    %v658 = vpack.c.b16 %v506, %v502
    %v659 = vpack.c.b16 %v507, %v503
    %v660 = vpack.c.b16 %v512, %v508
    %v661 = vpack.c.b16 %v513, %v509
    %v662 = vpack.c.b16 %v514, %v510
    %v663 = vpack.c.b16 %v515, %v511
    %v664 = vpack.c.b16 %v520, %v516
    %v665 = vpack.c.b16 %v521, %v517
    %v666 = vpack.c.b16 %v522, %v518
    %v667 = vpack.c.b16 %v523, %v519
    %v668 = vpack.c.b16 %v528, %v524
    %v669 = vpack.c.b16 %v529, %v525
    %v670 = vpack.c.b16 %v530, %v526
    %v671 = vpack.c.b16 %v531, %v527
    %v672 = vpack.c.b16 %v536, %v532
    %v673 = vpack.c.b16 %v537, %v533
    %v674 = vpack.c.b16 %v538, %v534
    %v675 = vpack.c.b16 %v539, %v535
    %v676 = vpack.c.b16 %v544, %v540
    %v677 = vpack.c.b16 %v545, %v541
    %v678 = vpack.c.b16 %v546, %v542
    %v679 = vpack.c.b16 %v547, %v543
    %v680 = vpack.c.b16 %v552, %v548
    %v681 = vpack.c.b16 %v553, %v549
    %v682 = vpack.c.b16 %v554, %v550
    %v683 = vpack.c.b16 %v555, %v551
    %812 = vmatpush.bf16.msra.mxu0 %v584
    %813 = vmatpush.bf16.msra.mxu0 %v580
    %814 = vmatpush.bf16.msra.mxu0 %v576
    %815 = vmatpush.bf16.msra.mxu0 %v572
    %816 = vmatpush.bf16.msra.mxu0 %v568
    %817 = vmatpush.bf16.msra.mxu0 %v564
    %818 = vmatpush.bf16.msra.mxu0 %v560
    %819 = vmatpush.bf16.msra.mxu0 %v556
    %820 = vmatmul.bf16.gmra.mxu0 %v164
    %v821 = vpop.f32.mrf.mxu0
    %v822 = vadd.f32 %v160, %v821
    %v823 = vpop.f32.mrf.mxu0
    %824 = vdwg.mxu0
    %825 = vmatpush.bf16.msra.mxu0 %v616
    %826 = vmatpush.bf16.msra.mxu0 %v612
    %827 = vmatpush.bf16.msra.mxu0 %v608
    %828 = vmatpush.bf16.msra.mxu0 %v604
    %829 = vmatpush.bf16.msra.mxu0 %v600
    %830 = vmatpush.bf16.msra.mxu0 %v596
    %831 = vmatpush.bf16.msra.mxu0 %v592
    %832 = vmatpush.bf16.msra.mxu0 %v588
    %833 = vmatmul.bf16.gmra.mxu0 %v165
    %v834 = vpop.f32.mrf.mxu0
    %v835 = vadd.f32 %v822, %v834
    %v836 = vpop.f32.mrf.mxu0
    %837 = vdwg.mxu0
    %838 = vmatpush.bf16.msra.mxu0 %v648
    %839 = vmatpush.bf16.msra.mxu0 %v644
    %840 = vmatpush.bf16.msra.mxu0 %v640
    %841 = vmatpush.bf16.msra.mxu0 %v636
    %842 = vmatpush.bf16.msra.mxu0 %v632
    %843 = vmatpush.bf16.msra.mxu0 %v628
    %844 = vmatpush.bf16.msra.mxu0 %v624
    %845 = vmatpush.bf16.msra.mxu0 %v620
    %846 = vmatmul.bf16.gmra.mxu0 %v166
    %v847 = vpop.f32.mrf.mxu0
    %v848 = vadd.f32 %v835, %v847
    %v849 = vpop.f32.mrf.mxu0
    %850 = vdwg.mxu0
    %851 = vmatpush.bf16.msra.mxu0 %v680
    %852 = vmatpush.bf16.msra.mxu0 %v676
    %853 = vmatpush.bf16.msra.mxu0 %v672
    %854 = vmatpush.bf16.msra.mxu0 %v668
    %855 = vmatpush.bf16.msra.mxu0 %v664
    %856 = vmatpush.bf16.msra.mxu0 %v660
    %857 = vmatpush.bf16.msra.mxu0 %v656
    %858 = vmatpush.bf16.msra.mxu0 %v652
    %859 = vmatmul.bf16.gmra.mxu0 %v167
    %v860 = vpop.f32.mrf.mxu0
    %v861 = vadd.f32 %v848, %v860
    %v862 = vpop.f32.mrf.mxu0
    %863 = vdwg.mxu0
    %864 = vmatpush.bf16.msra.mxu0 %v585
    %865 = vmatpush.bf16.msra.mxu0 %v581
    %866 = vmatpush.bf16.msra.mxu0 %v577
    %867 = vmatpush.bf16.msra.mxu0 %v573
    %868 = vmatpush.bf16.msra.mxu0 %v569
    %869 = vmatpush.bf16.msra.mxu0 %v565
    %870 = vmatpush.bf16.msra.mxu0 %v561
    %871 = vmatpush.bf16.msra.mxu0 %v557
    %872 = vmatmul.bf16.gmra.mxu0 %v164
    %v873 = vpop.f32.mrf.mxu0
    %v874 = vadd.f32 %v160, %v873
    %v875 = vpop.f32.mrf.mxu0
    %876 = vdwg.mxu0
    %877 = vmatpush.bf16.msra.mxu0 %v617
    %878 = vmatpush.bf16.msra.mxu0 %v613
    %879 = vmatpush.bf16.msra.mxu0 %v609
    %880 = vmatpush.bf16.msra.mxu0 %v605
    %881 = vmatpush.bf16.msra.mxu0 %v601
    %882 = vmatpush.bf16.msra.mxu0 %v597
    %883 = vmatpush.bf16.msra.mxu0 %v593
    %884 = vmatpush.bf16.msra.mxu0 %v589
    %885 = vmatmul.bf16.gmra.mxu0 %v165
    %v886 = vpop.f32.mrf.mxu0
    %v887 = vadd.f32 %v874, %v886
    %v888 = vpop.f32.mrf.mxu0
    %889 = vdwg.mxu0
    %890 = vmatpush.bf16.msra.mxu0 %v649
    %891 = vmatpush.bf16.msra.mxu0 %v645
    %892 = vmatpush.bf16.msra.mxu0 %v641
    %893 = vmatpush.bf16.msra.mxu0 %v637
    %894 = vmatpush.bf16.msra.mxu0 %v633
    %895 = vmatpush.bf16.msra.mxu0 %v629
    %896 = vmatpush.bf16.msra.mxu0 %v625
    %897 = vmatpush.bf16.msra.mxu0 %v621
    %898 = vmatmul.bf16.gmra.mxu0 %v166
    %v899 = vpop.f32.mrf.mxu0
    %v900 = vadd.f32 %v887, %v899
    %v901 = vpop.f32.mrf.mxu0
    %902 = vdwg.mxu0
    %903 = vmatpush.bf16.msra.mxu0 %v681
    %904 = vmatpush.bf16.msra.mxu0 %v677
    %905 = vmatpush.bf16.msra.mxu0 %v673
    %906 = vmatpush.bf16.msra.mxu0 %v669
    %907 = vmatpush.bf16.msra.mxu0 %v665
    %908 = vmatpush.bf16.msra.mxu0 %v661
    %909 = vmatpush.bf16.msra.mxu0 %v657
    %910 = vmatpush.bf16.msra.mxu0 %v653
    %911 = vmatmul.bf16.gmra.mxu0 %v167
    %v912 = vpop.f32.mrf.mxu0
    %v913 = vadd.f32 %v900, %v912
    %v914 = vpop.f32.mrf.mxu0
    %915 = vdwg.mxu0
    %916 = vmatpush.bf16.msra.mxu0 %v586
    %917 = vmatpush.bf16.msra.mxu0 %v582
    %918 = vmatpush.bf16.msra.mxu0 %v578
    %919 = vmatpush.bf16.msra.mxu0 %v574
    %920 = vmatpush.bf16.msra.mxu0 %v570
    %921 = vmatpush.bf16.msra.mxu0 %v566
    %922 = vmatpush.bf16.msra.mxu0 %v562
    %923 = vmatpush.bf16.msra.mxu0 %v558
    %924 = vmatmul.bf16.gmra.mxu0 %v164
    %v925 = vpop.f32.mrf.mxu0
    %v926 = vadd.f32 %v160, %v925
    %v927 = vpop.f32.mrf.mxu0
    %928 = vdwg.mxu0
    %929 = vmatpush.bf16.msra.mxu0 %v618
    %930 = vmatpush.bf16.msra.mxu0 %v614
    %931 = vmatpush.bf16.msra.mxu0 %v610
    %932 = vmatpush.bf16.msra.mxu0 %v606
    %933 = vmatpush.bf16.msra.mxu0 %v602
    %934 = vmatpush.bf16.msra.mxu0 %v598
    %935 = vmatpush.bf16.msra.mxu0 %v594
    %936 = vmatpush.bf16.msra.mxu0 %v590
    %937 = vmatmul.bf16.gmra.mxu0 %v165
    %v938 = vpop.f32.mrf.mxu0
    %v939 = vadd.f32 %v926, %v938
    %v940 = vpop.f32.mrf.mxu0
    %941 = vdwg.mxu0
    %942 = vmatpush.bf16.msra.mxu0 %v650
    %943 = vmatpush.bf16.msra.mxu0 %v646
    %944 = vmatpush.bf16.msra.mxu0 %v642
    %945 = vmatpush.bf16.msra.mxu0 %v638
    %946 = vmatpush.bf16.msra.mxu0 %v634
    %947 = vmatpush.bf16.msra.mxu0 %v630
    %948 = vmatpush.bf16.msra.mxu0 %v626
    %949 = vmatpush.bf16.msra.mxu0 %v622
    %950 = vmatmul.bf16.gmra.mxu0 %v166
    %v951 = vpop.f32.mrf.mxu0
    %v952 = vadd.f32 %v939, %v951
    %v953 = vpop.f32.mrf.mxu0
    %954 = vdwg.mxu0
    %955 = vmatpush.bf16.msra.mxu0 %v682
    %956 = vmatpush.bf16.msra.mxu0 %v678
    %957 = vmatpush.bf16.msra.mxu0 %v674
    %958 = vmatpush.bf16.msra.mxu0 %v670
    %959 = vmatpush.bf16.msra.mxu0 %v666
    %960 = vmatpush.bf16.msra.mxu0 %v662
    %961 = vmatpush.bf16.msra.mxu0 %v658
    %962 = vmatpush.bf16.msra.mxu0 %v654
    %963 = vmatmul.bf16.gmra.mxu0 %v167
    %v964 = vpop.f32.mrf.mxu0
    %v965 = vadd.f32 %v952, %v964
    %v966 = vpop.f32.mrf.mxu0
    %967 = vdwg.mxu0
    %968 = vmatpush.bf16.msra.mxu0 %v587
    %969 = vmatpush.bf16.msra.mxu0 %v583
    %970 = vmatpush.bf16.msra.mxu0 %v579
    %971 = vmatpush.bf16.msra.mxu0 %v575
    %972 = vmatpush.bf16.msra.mxu0 %v571
    %973 = vmatpush.bf16.msra.mxu0 %v567
    %974 = vmatpush.bf16.msra.mxu0 %v563
    %975 = vmatpush.bf16.msra.mxu0 %v559
    %976 = vmatmul.bf16.gmra.mxu0 %v164
    %v977 = vpop.f32.mrf.mxu0
    %v978 = vadd.f32 %v160, %v977
    %v979 = vpop.f32.mrf.mxu0
    %980 = vdwg.mxu0
    %981 = vmatpush.bf16.msra.mxu0 %v619
    %982 = vmatpush.bf16.msra.mxu0 %v615
    %983 = vmatpush.bf16.msra.mxu0 %v611
    %984 = vmatpush.bf16.msra.mxu0 %v607
    %985 = vmatpush.bf16.msra.mxu0 %v603
    %986 = vmatpush.bf16.msra.mxu0 %v599
    %987 = vmatpush.bf16.msra.mxu0 %v595
    %988 = vmatpush.bf16.msra.mxu0 %v591
    %989 = vmatmul.bf16.gmra.mxu0 %v165
    %v990 = vpop.f32.mrf.mxu0
    %v991 = vadd.f32 %v978, %v990
    %v992 = vpop.f32.mrf.mxu0
    %993 = vdwg.mxu0
    %994 = vmatpush.bf16.msra.mxu0 %v651
    %995 = vmatpush.bf16.msra.mxu0 %v647
    %996 = vmatpush.bf16.msra.mxu0 %v643
    %997 = vmatpush.bf16.msra.mxu0 %v639
    %998 = vmatpush.bf16.msra.mxu0 %v635
    %999 = vmatpush.bf16.msra.mxu0 %v631
    %1000 = vmatpush.bf16.msra.mxu0 %v627
    %1001 = vmatpush.bf16.msra.mxu0 %v623
    %1002 = vmatmul.bf16.gmra.mxu0 %v166
    %v1003 = vpop.f32.mrf.mxu0
    %v1004 = vadd.f32 %v991, %v1003
    %v1005 = vpop.f32.mrf.mxu0
    %1006 = vdwg.mxu0
    %1007 = vmatpush.bf16.msra.mxu0 %v683
    %1008 = vmatpush.bf16.msra.mxu0 %v679
    %1009 = vmatpush.bf16.msra.mxu0 %v675
    %1010 = vmatpush.bf16.msra.mxu0 %v671
    %1011 = vmatpush.bf16.msra.mxu0 %v667
    %1012 = vmatpush.bf16.msra.mxu0 %v663
    %1013 = vmatpush.bf16.msra.mxu0 %v659
    %1014 = vmatpush.bf16.msra.mxu0 %v655
    %1015 = vmatmul.bf16.gmra.mxu0 %v167
    %v1016 = vpop.f32.mrf.mxu0
    %v1017 = vadd.f32 %v1004, %v1016
    %v1018 = vpop.f32.mrf.mxu0
    %1019 = vdwg.mxu0
    %s1020 = sadd.s32 %s150, 0
    %v1021 = vlaneseq
    %v1022 = vand.u32 %v1021, 127
    %v1023 = vadd.s32 %v1022, 128
    %v1024 = vadd.s32 %v1022, 256
    %v1025 = vadd.s32 %v1022, 384
    %v1026 = vstv %s1020
    %v1027 = vadd.s32 %v1026, %v1022
    %v1028 = vadd.s32 %v1026, %v1023
    %v1029 = vadd.s32 %v1026, %v1024
    %v1030 = vadd.s32 %v1026, %v1025
    %v1031 = vcvt.s32.f32 %v1027
    %v1032 = vcvt.s32.f32 %v1028
    %v1033 = vcvt.s32.f32 %v1029
    %v1034 = vcvt.s32.f32 %v1030
    %vm1035 = vcmp.eq.s32.totalorder %v1027, 0
    %vm1036 = vcmp.eq.s32.totalorder %v1028, 0
    %vm1037 = vcmp.eq.s32.totalorder %v1029, 0
    %vm1038 = vcmp.eq.s32.totalorder %v1030, 0
    %v1039 = vadd.f32 %v1031, 1.0
    %v1040 = vadd.f32 %v1032, 1.0
    %v1041 = vadd.f32 %v1033, 1.0
    %v1042 = vadd.f32 %v1034, 1.0
    %1044 = vset.pattern.permute.xlu0 0
    %1045 = vperm.xlu0 %1044, %v21
    %v1046 = vpop.permute.xlu0 %1045
    %v1048 = vadd.f32 %v1046, %v1039
    %v1049 = vadd.f32 %v1046, %v1040
    %v1050 = vadd.f32 %v1046, %v1041
    %v1051 = vadd.f32 %v1046, %v1042
    %v1052 = vsub.f32 %v1048, %v861
    %v1053 = vsub.f32 %v1049, %v913
    %v1054 = vsub.f32 %v1050, %v965
    %v1055 = vsub.f32 %v1051, %v1017
    %v1056 = vsub.f32 %v1046, %v861
    %v1057 = vsub.f32 %v1046, %v913
    %v1058 = vsub.f32 %v1046, %v965
    %v1059 = vsub.f32 %v1046, %v1017
    %v1060 = vrcp.pop %v1052
    %v1061 = vmul.f32 %v1052, %v1060
    %v1062 = vsub.f32 1.0, %v1061
    %v1063 = vmul.f32 %v1060, %v1062
    %v1064 = vadd.f32 %v1060, %v1063
    %vm1065 = vweird.f32 %v1052
    %vm1066 = vweird.f32 %v1060
    %vm1067 = vmor %vm1065, %vm1066
    %v1068 = vsel %vm1067, %v1060, %v1064
    %v1069 = vand.u32 2147483647, %v1052
    %vm1070 = vcmp.eq.f32.partialorder %v1069, 8.507059e+37
    %v1071 = vand.u32 %v1052, 2147483648
    %v1072 = vor.u32 1.1754944e-38, %v1071
    %v1073 = vsel %vm1070, %v1072, %v1068
    %v1074 = vrcp.pop %v1053
    %v1075 = vmul.f32 %v1053, %v1074
    %v1076 = vsub.f32 1.0, %v1075
    %v1077 = vmul.f32 %v1074, %v1076
    %v1078 = vadd.f32 %v1074, %v1077
    %vm1079 = vweird.f32 %v1053
    %vm1080 = vweird.f32 %v1074
    %vm1081 = vmor %vm1079, %vm1080
    %v1082 = vsel %vm1081, %v1074, %v1078
    %v1083 = vand.u32 2147483647, %v1053
    %vm1084 = vcmp.eq.f32.partialorder %v1083, 8.507059e+37
    %v1085 = vand.u32 %v1053, 2147483648
    %v1086 = vor.u32 1.1754944e-38, %v1085
    %v1087 = vsel %vm1084, %v1086, %v1082
    %v1088 = vrcp.pop %v1054
    %v1089 = vmul.f32 %v1054, %v1088
    %v1090 = vsub.f32 1.0, %v1089
    %v1091 = vmul.f32 %v1088, %v1090
    %v1092 = vadd.f32 %v1088, %v1091
    %vm1093 = vweird.f32 %v1054
    %vm1094 = vweird.f32 %v1088
    %vm1095 = vmor %vm1093, %vm1094
    %v1096 = vsel %vm1095, %v1088, %v1092
    %v1097 = vand.u32 2147483647, %v1054
    %vm1098 = vcmp.eq.f32.partialorder %v1097, 8.507059e+37
    %v1099 = vand.u32 %v1054, 2147483648
    %v1100 = vor.u32 1.1754944e-38, %v1099
    %v1101 = vsel %vm1098, %v1100, %v1096
    %v1102 = vrcp.pop %v1055
    %v1103 = vmul.f32 %v1055, %v1102
    %v1104 = vsub.f32 1.0, %v1103
    %v1105 = vmul.f32 %v1102, %v1104
    %v1106 = vadd.f32 %v1102, %v1105
    %vm1107 = vweird.f32 %v1055
    %vm1108 = vweird.f32 %v1102
    %vm1109 = vmor %vm1107, %vm1108
    %v1110 = vsel %vm1109, %v1102, %v1106
    %v1111 = vand.u32 2147483647, %v1055
    %vm1112 = vcmp.eq.f32.partialorder %v1111, 8.507059e+37
    %v1113 = vand.u32 %v1055, 2147483648
    %v1114 = vor.u32 1.1754944e-38, %v1113
    %v1115 = vsel %vm1112, %v1114, %v1110
    %v1116 = vmul.f32 %v1056, %v1073
    %v1117 = vmul.f32 %v1057, %v1087
    %v1118 = vmul.f32 %v1058, %v1101
    %v1119 = vmul.f32 %v1059, %v1115
    %v1120 = vsub.f32 1.0, %v1116
    %v1121 = vsub.f32 1.0, %v1117
    %v1122 = vsub.f32 1.0, %v1118
    %v1123 = vsub.f32 1.0, %v1119
    %1126 = vst [vmem:[#allocation1] ss:$2 sm:$0xff] %v155
    %s1127 = scalar_lea.vmem [#allocation1], 16
    %1128 = vst [vmem:[%s1127] ss:$2 sm:$0xff] %v156
    %v1129 = vld.sshfl [vmem:[#allocation1] sm:$0xff pattern:$0x75316420]
    %v1130 = vld.sshfl [vmem:[#allocation1 + $0x8] sm:$0xff pattern:$0x75316420]
    %v1131 = vld.sshfl [vmem:[#allocation1 + $0x10] sm:$0xff pattern:$0x75316420]
    %v1132 = vld.sshfl [vmem:[#allocation1 + $0x18] sm:$0xff pattern:$0x75316420]
    %v1137 = vsub.f32 %v861, %v1129
    %v1138 = vsub.f32 %v913, %v1130
    %v1139 = vsub.f32 %v965, %v1131
    %v1140 = vsub.f32 %v1017, %v1132
    %v1141 = vadd.f32 %v1046, %v1031
    %v1142 = vadd.f32 %v1046, %v1032
    %v1143 = vadd.f32 %v1046, %v1033
    %v1144 = vadd.f32 %v1046, %v1034
    %v1145 = vsub.f32 %v1141, %v1137
    %v1146 = vsub.f32 %v1142, %v1138
    %v1147 = vsub.f32 %v1143, %v1139
    %v1148 = vsub.f32 %v1144, %v1140
    %v1149 = vsel %vm1035, 1.0, %v1145
    %v1150 = vsel %vm1036, 1.0, %v1146
    %v1151 = vsel %vm1037, 1.0, %v1147
    %v1152 = vsel %vm1038, 1.0, %v1148
    %v1153 = vsub.f32 %v1046, %v1137
    %v1154 = vsub.f32 %v1046, %v1138
    %v1155 = vsub.f32 %v1046, %v1139
    %v1156 = vsub.f32 %v1046, %v1140
    %v1157 = vrcp.pop %v1149
    %v1158 = vmul.f32 %v1149, %v1157
    %v1159 = vsub.f32 1.0, %v1158
    %v1160 = vmul.f32 %v1157, %v1159
    %v1161 = vadd.f32 %v1157, %v1160
    %vm1162 = vweird.f32 %v1149
    %vm1163 = vweird.f32 %v1157
    %vm1164 = vmor %vm1162, %vm1163
    %v1165 = vsel %vm1164, %v1157, %v1161
    %v1166 = vand.u32 2147483647, %v1149
    %vm1167 = vcmp.eq.f32.partialorder %v1166, 8.507059e+37
    %v1168 = vand.u32 %v1149, 2147483648
    %v1169 = vor.u32 1.1754944e-38, %v1168
    %v1170 = vsel %vm1167, %v1169, %v1165
    %v1171 = vrcp.pop %v1150
    %v1172 = vmul.f32 %v1150, %v1171
    %v1173 = vsub.f32 1.0, %v1172
    %v1174 = vmul.f32 %v1171, %v1173
    %v1175 = vadd.f32 %v1171, %v1174
    %vm1176 = vweird.f32 %v1150
    %vm1177 = vweird.f32 %v1171
    %vm1178 = vmor %vm1176, %vm1177
    %v1179 = vsel %vm1178, %v1171, %v1175
    %v1180 = vand.u32 2147483647, %v1150
    %vm1181 = vcmp.eq.f32.partialorder %v1180, 8.507059e+37
    %v1182 = vand.u32 %v1150, 2147483648
    %v1183 = vor.u32 1.1754944e-38, %v1182
    %v1184 = vsel %vm1181, %v1183, %v1179
    %v1185 = vrcp.pop %v1151
    %v1186 = vmul.f32 %v1151, %v1185
    %v1187 = vsub.f32 1.0, %v1186
    %v1188 = vmul.f32 %v1185, %v1187
    %v1189 = vadd.f32 %v1185, %v1188
    %vm1190 = vweird.f32 %v1151
    %vm1191 = vweird.f32 %v1185
    %vm1192 = vmor %vm1190, %vm1191
    %v1193 = vsel %vm1192, %v1185, %v1189
    %v1194 = vand.u32 2147483647, %v1151
    %vm1195 = vcmp.eq.f32.partialorder %v1194, 8.507059e+37
    %v1196 = vand.u32 %v1151, 2147483648
    %v1197 = vor.u32 1.1754944e-38, %v1196
    %v1198 = vsel %vm1195, %v1197, %v1193
    %v1199 = vrcp.pop %v1152
    %v1200 = vmul.f32 %v1152, %v1199
    %v1201 = vsub.f32 1.0, %v1200
    %v1202 = vmul.f32 %v1199, %v1201
    %v1203 = vadd.f32 %v1199, %v1202
    %vm1204 = vweird.f32 %v1152
    %vm1205 = vweird.f32 %v1199
    %vm1206 = vmor %vm1204, %vm1205
    %v1207 = vsel %vm1206, %v1199, %v1203
    %v1208 = vand.u32 2147483647, %v1152
    %vm1209 = vcmp.eq.f32.partialorder %v1208, 8.507059e+37
    %v1210 = vand.u32 %v1152, 2147483648
    %v1211 = vor.u32 1.1754944e-38, %v1210
    %v1212 = vsel %vm1209, %v1211, %v1207
    %v1213 = vmul.f32 %v1153, %v1170
    %v1214 = vmul.f32 %v1154, %v1184
    %v1215 = vmul.f32 %v1155, %v1198
    %v1216 = vmul.f32 %v1156, %v1212
    %v1217 = vsub.f32 1.0, %v1213
    %v1218 = vsub.f32 1.0, %v1214
    %v1219 = vsub.f32 1.0, %v1215
    %v1220 = vsub.f32 1.0, %v1216
    %v1221 = vsel %vm1035, 0.0, %v1217
    %v1222 = vsel %vm1036, 0.0, %v1218
    %v1223 = vsel %vm1037, 0.0, %v1219
    %v1224 = vsel %vm1038, 0.0, %v1220
    %v1225 = vsub.f32 %v1120, %v1221
    %v1226 = vsub.f32 %v1121, %v1222
    %v1227 = vsub.f32 %v1122, %v1223
    %v1228 = vsub.f32 %v1123, %v1224
    %v1233 = vrot.slane %v1226, 4
    %v1234 = vrot.slane %v1228, 4
    %vm1235 = vcmask 1043456
    %v1236 = vsel %vm1235, %v1225, %v1233
    %v1237 = vsel %vm1235, %v1227, %v1234
    %v1240 = vmul.f32 %v152, %v1236
    %v1241 = vmul.f32 %v153, %v1237
    %1244 = vst [vmem:[#allocation1] ss:$2 sm:$0xff] %v1240
    %s1245 = scalar_lea.vmem [#allocation1], 16
    %1246 = vst [vmem:[%s1245] ss:$2 sm:$0xff] %v1241
    %v1247 = vld.sshfl [vmem:[#allocation1] sm:$0xff pattern:$0x75316420]
    %v1248 = vld.sshfl [vmem:[#allocation1 + $0x8] sm:$0xff pattern:$0x75316420]
    %v1249 = vld.sshfl [vmem:[#allocation1 + $0x10] sm:$0xff pattern:$0x75316420]
    %v1250 = vld.sshfl [vmem:[#allocation1 + $0x18] sm:$0xff pattern:$0x75316420]
    %v1255 = vsel %vm1235, %v1247, 0.0
    %v1256 = vsel %vm1235, %v1248, 0.0
    %v1257 = vadd.f32 %v1255, %v1256
    %v1258 = vsel %vm1235, %v1249, 0.0
    %v1259 = vadd.f32 %v1257, %v1258
    %v1260 = vsel %vm1235, %v1250, 0.0
    %v1261 = vadd.f32 %v1259, %v1260
    %1262 = vadd.xlane.f32.xlu0 %v1261
    %v1263 = vpop.xlane.xlu0 %1262
    %v1264 = vadd.f32 %v1263, 0.0
    %vm1265 = vcmp.gt.f32.partialorder %v21, 0.0
    %v1266 = vsel %vm1265, 1, 0
    %v1267 = vcvt.s32.f32 %v1266
    %v1268 = vmul.f32 %v1264, %v1267
    %vm1269 = vcmask 3072
    %v1270 = vsel %vm1269, %v1268, 0.0
    %v1271 = vrot.slane %v1270, 4
    %v1272 = vadd.f32 %v1270, %v1271
    %v1273 = vrot.slane %v1272, 2
    %v1274 = vadd.f32 %v1272, %v1273
    %v1275 = vrot.slane %v1274, 1
    %v1276 = vadd.f32 %v1274, %v1275
    %vm1277 = vcmask 0
    %1278 = vst.msk [vmem:[#allocation2] sm:$0x1] %vm1277, %v1276
    // Predicated region
    $region22: #{lovasz_softmax_loss.3} parent=1 // pred_check
      _
    $region23: #{lovasz_softmax_loss.3} parent=1 // pred_check_branch
      %1280 = sbr.rel (0) target = $region25
    $region24: #{lovasz_softmax_loss.3} parent=1 // pred_region
      %1282 = vsyncadd [#allocation3], 0
      %s1284 = sshll.u32 [#allocation2], 4
      %s1285 = int_to_ptr.vmem [resolvable:$true] %s1284
      %s1286 = sshll.u32 %s5, 4
      %s1287 = int_to_ptr.hbm [resolvable:$true] %s1286
      %1289 = dma.vmem_to_hbm [thread:$0]  %s1285, 16, %s1287, [#allocation3]
    $region25: #{lovasz_softmax_loss.3} parent=1 // pred_fallthru
      _
    // Predicated region
    $region26: #{lovasz_softmax_loss.3} parent=1 // pred_check
      _
    $region27: #{lovasz_softmax_loss.3} parent=1 // pred_check_branch
      %1291 = sbr.rel (0) target = $region29
    $region28: #{lovasz_softmax_loss.3} parent=1 // pred_region
      %1293 = dma.done [#allocation3], 16
    $region29: #{lovasz_softmax_loss.3} parent=1 // pred_fallthru
      _
    %1294 = vsyncpa [#allocation3], 1

</llo_original>
